<compile_context>
chip_gen: v5e
topology: v5e:2x2
jax: 0.10.0
libtpu: 0.0.40
codegen_flags: <defaults>
</compile_context>

<pallas_src>
import functools
import math

import jax
import jax.numpy as jnp
from jax.experimental import pallas as pl
from jax.experimental.pallas import tpu as pltpu  # noqa: F401  (TPU backend)


# -----------------------------------------------------------------------------
# Fused forward kernel
# -----------------------------------------------------------------------------
def _actor_fused_kernel(n_agents, bsz, input_size, h_dim, n_rounds,
                        inp_ref, bias_ref,
                        enc_w_ref, enc_b_ref, ee_w_ref, ee_b_ref,
                        em_wq_ref, em_wkv_ref, em_wo_ref,
                        eu_w1_ref, eu_w2_ref, eu_b_ref,
                        ms_wqkv_ref, ms_wo_ref,
                        up_w1_ref, up_w2_ref, up_b_ref,
                        m2_w_ref, m2_b_ref, m3_w_ref, m3_b_ref,
                        out_ref):
    H = h_dim
    E = n_agents                      # num_entities == n_agents
    norm = 1.0 / math.sqrt(H)         # key_dim = embed_dim // n_heads = H

    x = inp_ref[...]                                   # (N, D_IN) f32
    d_in = x.shape[1]
    agent_inp = x[:, :input_size]                      # (N, input_size)
    lm = x[:, d_in - 2 * E:]                           # (N, 2E) landmark coords

    # ---------------- encoder: relu(agent_inp @ Wenc + b) ----------------
    h = jnp.maximum(
        jnp.dot(agent_inp, enc_w_ref[...], preferred_element_type=jnp.float32)
        + enc_b_ref[...], 0.0)                         # (N, H)

    # ---------------- entity encoder + entity attention ----------------
    # entity encoder (Din=2) as VPU broadcast-FMAs: he_e = relu(x0*W0 + x1*W1 + b)
    ee_w0 = ee_w_ref[0:1, :]                           # (1, H)
    ee_w1 = ee_w_ref[1:2, :]                           # (1, H)
    ee_b = ee_b_ref[...]                               # (1, H)

    Qe = jnp.dot(h, em_wq_ref[...], preferred_element_type=jnp.float32)   # (N, H)

    c_list = []
    v_list = []
    for e in range(E):                                 # static unroll, E small
        x0 = lm[:, 2 * e:2 * e + 1]                    # (N, 1)
        x1 = lm[:, 2 * e + 1:2 * e + 2]                # (N, 1)
        he_e = jnp.maximum(x0 * ee_w0 + x1 * ee_w1 + ee_b, 0.0)           # (N, H)
        kv_e = jnp.dot(he_e, em_wkv_ref[...],
                       preferred_element_type=jnp.float32)               # (N, 2H)
        k_e = kv_e[:, :H]
        v_e = kv_e[:, H:]
        c_e = norm * jnp.sum(Qe * k_e, axis=-1, keepdims=True)            # (N, 1)
        c_list.append(c_e)
        v_list.append(v_e)

    # streamed softmax over the E entity scores (no (N,E) tensor materialized)
    c_max = c_list[0]
    for e in range(1, E):
        c_max = jnp.maximum(c_max, c_list[e])
    denom = None
    numer = None
    for e in range(E):
        w_e = jnp.exp(c_list[e] - c_max)               # (N, 1)
        denom = w_e if denom is None else denom + w_e
        contrib = w_e * v_list[e]                      # (N, H)
        numer = contrib if numer is None else numer + contrib
    em_pre = numer * pl.reciprocal(denom, approx=True)                   # (N, H)
    em = jnp.dot(em_pre, em_wo_ref[...], preferred_element_type=jnp.float32)

    # entity_update: relu([h, em] @ Weu + b) with the concat split into two dots
    h = jnp.maximum(
        jnp.dot(h, eu_w1_ref[...], preferred_element_type=jnp.float32)
        + jnp.dot(em, eu_w2_ref[...], preferred_element_type=jnp.float32)
        + eu_b_ref[...], 0.0)                          # (N, H)

    # ---------------- K rounds of agent-to-agent message passing ----------------
    # h stays in agent-major (N, H) order; cross-batch attention pairs are killed
    # with an additive -1e30 bias (exactly equivalent to the batched softmax).
    bias = bias_ref[...]                               # (N, N)
    for _ in range(n_rounds):                          # static unroll, K = 3
        qkv = jnp.dot(h, ms_wqkv_ref[...], preferred_element_type=jnp.float32)  # (N, 3H)
        q = qkv[:, :H]
        k = qkv[:, H:2 * H]
        v = qkv[:, 2 * H:]
        compat = norm * jax.lax.dot_general(
            q, k, (((1,), (1,)), ((), ())), preferred_element_type=jnp.float32)  # (N, N)
        compat = compat + bias
        compat = compat - jnp.max(compat, axis=-1, keepdims=True)
        ew = jnp.exp(compat)
        attn = ew * pl.reciprocal(jnp.sum(ew, axis=-1, keepdims=True), approx=True)
        heads = jnp.dot(attn, v, preferred_element_type=jnp.float32)     # (N, H)
        m = jnp.dot(heads, ms_wo_ref[...], preferred_element_type=jnp.float32)
        # update: relu([h, m] @ Wup + b)  (concat split into two dots)
        h = jnp.maximum(
            jnp.dot(h, up_w1_ref[...], preferred_element_type=jnp.float32)
            + jnp.dot(m, up_w2_ref[...], preferred_element_type=jnp.float32)
            + up_b_ref[...], 0.0)

    # ---------------- merge layer: Linear + LeakyReLU + Linear + Tanh ----------------
    y = jnp.dot(h, m2_w_ref[...], preferred_element_type=jnp.float32) + m2_b_ref[...]
    y = jnp.where(y >= 0.0, y, 0.01 * y)               # nn.LeakyReLU default slope
    out = jnp.tanh(
        jnp.dot(y, m3_w_ref[...], preferred_element_type=jnp.float32) + m3_b_ref[...])
    out_ref[...] = out.astype(out_ref.dtype)


# -----------------------------------------------------------------------------
# Host wrapper: one pallas_call, whole arrays as VMEM blocks (no grid needed)
# -----------------------------------------------------------------------------
def attention_actor_forward(inp, kp, *, n_agents, input_size, h_dim, K=3):
    N = inp.shape[0]
    bsz = N // n_agents
    out_dim = kp["m3_w"].shape[1]

    # Additive cross-batch mask for the flat agent-major attention. Depends only
    # on (N, bsz) — a compile-time constant under jit.
    batch_idx = jnp.arange(N, dtype=jnp.int32) % bsz
    attn_bias = jnp.where(batch_idx[:, None] == batch_idx[None, :],
                          0.0, -1e30).astype(jnp.float32)

    kernel = functools.partial(
        _actor_fused_kernel, n_agents, bsz, input_size, h_dim, K)

    # TODO(synk): for large RL batches, add a leading "parallel" batch grid axis
    # (shards across v7x's 2 TensorCores); at these sizes one block is optimal.
    return pl.pallas_call(
        kernel,
        out_shape=jax.ShapeDtypeStruct((N, out_dim), jnp.float32),
    )(inp, attn_bias,
      kp["enc_w"], kp["enc_b"], kp["ee_w"], kp["ee_b"],
      kp["em_wq"], kp["em_wkv"], kp["em_wo"],
      kp["eu_w1"], kp["eu_w2"], kp["eu_b"],
      kp["ms_wqkv"], kp["ms_wo"],
      kp["up_w1"], kp["up_w2"], kp["up_b"],
      kp["m2_w"], kp["m2_b"], kp["m3_w"], kp["m3_b"])


# -----------------------------------------------------------------------------
# One-time parameter preparation (weight concat/split, bias reshape)
# -----------------------------------------------------------------------------
def prepare_params(p, h_dim):
    H = h_dim
    return {
        "enc_w": p["enc_w"], "enc_b": p["enc_b"].reshape(1, -1),
        "ee_w": p["ee_w"], "ee_b": p["ee_b"].reshape(1, -1),
        "em_wq": p["em_wq"],
        "em_wkv": jnp.concatenate([p["em_wk"], p["em_wv"]], axis=1),   # (H, 2H)
        "em_wo": p["em_wo"],
        "eu_w1": p["eu_w"][:H], "eu_w2": p["eu_w"][H:],
        "eu_b": p["eu_b"].reshape(1, -1),
        "ms_wqkv": jnp.concatenate([p["ms_wq"], p["ms_wk"], p["ms_wv"]], axis=1),  # (H, 3H)
        "ms_wo": p["ms_wo"],
        "up_w1": p["up_w"][:H], "up_w2": p["up_w"][H:],
        "up_b": p["up_b"].reshape(1, -1),
        "m2_w": p["m2_w"], "m2_b": p["m2_b"].reshape(1, -1),
        "m3_w": p["m3_w"], "m3_b": p["m3_b"].reshape(1, -1),
    }


# -----------------------------------------------------------------------------
# Pure-JAX reference (same math) for correctness checking
# -----------------------------------------------------------------------------
def _ref_mha(q, kv, wq, wk, wv, wo):
    norm = 1.0 / math.sqrt(wq.shape[1])
    Q = q @ wq
    Kk = kv @ wk
    V = kv @ wv
    compat = norm * jnp.einsum("bqd,bkd->bqk", Q, Kk)
    attn = jax.nn.softmax(compat, axis=-1)
    heads = jnp.einsum("bqk,bkd->bqd", attn, V)
    return heads @ wo


def reference_forward(inp, p, *, n_agents, input_size, h_dim, K=3):
    N = inp.shape[0]
    bsz = N // n_agents
    h = jax.nn.relu(inp[:, :input_size] @ p["enc_w"] + p["enc_b"])
    lm = inp[:, -n_agents * 2:].reshape(-1, 2)
    he = jax.nn.relu(lm @ p["ee_w"] + p["ee_b"]).reshape(N, n_agents, h_dim)
    em = _ref_mha(h[:, None, :], he,
                  p["em_wq"], p["em_wk"], p["em_wv"], p["em_wo"])[:, 0, :]
    h = jax.nn.relu(jnp.concatenate([h, em], axis=1) @ p["eu_w"] + p["eu_b"])
    h = h.reshape(n_agents, bsz, h_dim).transpose(1, 0, 2)
    for _ in range(K):
        m = _ref_mha(h, h, p["ms_wq"], p["ms_wk"], p["ms_wv"], p["ms_wo"])
        h = jax.nn.relu(jnp.concatenate([h, m], axis=2) @ p["up_w"] + p["up_b"])
    h = h.transpose(1, 0, 2).reshape(N, h_dim)
    out = h @ p["m2_w"] + p["m2_b"]
    out = jnp.where(out >= 0.0, out, 0.01 * out)
    out = jnp.tanh(out @ p["m3_w"] + p["m3_b"])
    return out


# -----------------------------------------------------------------------------
# Deterministic parameter construction
# -----------------------------------------------------------------------------
def make_params(key, input_size, h_dim):
    names_shapes = [
        ("enc_w", (input_size, h_dim)), ("enc_b", (h_dim,)),
        ("ee_w", (2, h_dim)), ("ee_b", (h_dim,)),
        ("em_wq", (h_dim, h_dim)), ("em_wk", (h_dim, h_dim)),
        ("em_wv", (h_dim, h_dim)), ("em_wo", (h_dim, h_dim)),
        ("eu_w", (2 * h_dim, h_dim)), ("eu_b", (h_dim,)),
        ("ms_wq", (h_dim, h_dim)), ("ms_wk", (h_dim, h_dim)),
        ("ms_wv", (h_dim, h_dim)), ("ms_wo", (h_dim, h_dim)),
        ("up_w", (2 * h_dim, h_dim)), ("up_b", (h_dim,)),
        ("m2_w", (h_dim, h_dim)), ("m2_b", (h_dim,)),
        ("m3_w", (h_dim, 2)), ("m3_b", (2,)),
    ]
    params = {}
    keys = jax.random.split(key, len(names_shapes))
    for (name, shape), k in zip(names_shapes, keys):
        if name.endswith("_b"):
            params[name] = jnp.zeros(shape, jnp.float32)    # module fills biases with 0
        else:
            params[name] = 0.1 * jax.random.normal(k, shape, jnp.float32)
    return params


# -----------------------------------------------------------------------------
if __name__ == "__main__":
    N_AGENTS = 3           # args.n_agents  (== num_entities)
    BSZ = 2
    INPUT_SIZE = 16
    H_DIM = 32             # hidden_dim (embed_dim = h_dim)
    K_ROUNDS = 3
    N = N_AGENTS * BSZ
    D_IN = INPUT_SIZE + 2 * N_AGENTS     # agent obs + landmark (x, y) per entity

    key = jax.random.PRNGKey(0)
    pkey, xkey = jax.random.split(key)
    params = make_params(pkey, INPUT_SIZE, H_DIM)
    kparams = prepare_params(params, H_DIM)
    inp = jax.random.normal(xkey, (N, D_IN), jnp.float32)

    out = attention_actor_forward(
        inp, kparams, n_agents=N_AGENTS, input_size=INPUT_SIZE,
        h_dim=H_DIM, K=K_ROUNDS)
    out = jax.block_until_ready(out)

    ref = reference_forward(
        inp, params, n_agents=N_AGENTS, input_size=INPUT_SIZE,
        h_dim=H_DIM, K=K_ROUNDS)
    assert out.shape == (N, 2), out.shape
    # tolerance allows for approx-reciprocal softmax denominators in the kernel
    assert jnp.allclose(out, ref, atol=5e-3, rtol=5e-3), (
        "mismatch: " + str(jnp.max(jnp.abs(out - ref))))
    print("KERNEL_OK")
</pallas_src>

<mosaic_0001>
module attributes {stable_mosaic.version = 11 : i64} {
  func.func @_actor_fused_kernel(%arg0: memref<6x22xf32, #tpu.memory_space<vmem>>, %arg1: memref<6x6xf32, #tpu.memory_space<vmem>>, %arg2: memref<16x32xf32, #tpu.memory_space<vmem>>, %arg3: memref<1x32xf32, #tpu.memory_space<vmem>>, %arg4: memref<2x32xf32, #tpu.memory_space<vmem>>, %arg5: memref<1x32xf32, #tpu.memory_space<vmem>>, %arg6: memref<32x32xf32, #tpu.memory_space<vmem>>, %arg7: memref<32x64xf32, #tpu.memory_space<vmem>>, %arg8: memref<32x32xf32, #tpu.memory_space<vmem>>, %arg9: memref<32x32xf32, #tpu.memory_space<vmem>>, %arg10: memref<32x32xf32, #tpu.memory_space<vmem>>, %arg11: memref<1x32xf32, #tpu.memory_space<vmem>>, %arg12: memref<32x96xf32, #tpu.memory_space<vmem>>, %arg13: memref<32x32xf32, #tpu.memory_space<vmem>>, %arg14: memref<32x32xf32, #tpu.memory_space<vmem>>, %arg15: memref<32x32xf32, #tpu.memory_space<vmem>>, %arg16: memref<1x32xf32, #tpu.memory_space<vmem>>, %arg17: memref<32x32xf32, #tpu.memory_space<vmem>>, %arg18: memref<1x32xf32, #tpu.memory_space<vmem>>, %arg19: memref<32x2xf32, #tpu.memory_space<vmem>>, %arg20: memref<1x2xf32, #tpu.memory_space<vmem>>, %arg21: memref<6x2xf32, #tpu.memory_space<vmem>>) attributes {dimension_semantics = [], scalar_prefetch = 0 : i64, scratch_operands = 0 : i64, tpu.core_type = #tpu.core_type<tc>} {
    %c0 = arith.constant 0 : index
    %c0_0 = arith.constant 0 : index
    %0 = vector.load %arg0[%c0, %c0_0] : memref<6x22xf32, #tpu.memory_space<vmem>>, vector<6x22xf32>
    %1 = vector.extract_strided_slice %0 {offsets = [0, 0], sizes = [6, 16], strides = [1, 1]} : vector<6x22xf32> to vector<6x16xf32>
    %2 = vector.extract_strided_slice %0 {offsets = [0, 16], sizes = [6, 6], strides = [1, 1]} : vector<6x22xf32> to vector<6x6xf32>
    %c0_1 = arith.constant 0 : index
    %c0_2 = arith.constant 0 : index
    %3 = vector.load %arg2[%c0_1, %c0_2] : memref<16x32xf32, #tpu.memory_space<vmem>>, vector<16x32xf32>
    %cst = arith.constant dense<0.000000e+00> : vector<6x32xf32>
    %4 = tpu.matmul %1, %3, %cst {dimension_numbers = #tpu.dot_dimension_numbers<[1], [0], [0], [1], [0, 0, 1, 1], [], []>} : vector<6x16xf32>, vector<16x32xf32>, vector<6x32xf32> -> vector<6x32xf32>
    %c0_3 = arith.constant 0 : index
    %c0_4 = arith.constant 0 : index
    %5 = vector.load %arg3[%c0_3, %c0_4] : memref<1x32xf32, #tpu.memory_space<vmem>>, vector<1x32xf32>
    %6 = vector.broadcast %5 : vector<1x32xf32> to vector<6x32xf32>
    %7 = arith.addf %4, %6 : vector<6x32xf32>
    %cst_5 = arith.constant 0.000000e+00 : f32
    %8 = vector.broadcast %cst_5 : f32 to vector<6x32xf32>
    %9 = arith.maximumf %7, %8 : vector<6x32xf32>
    %c0_6 = arith.constant 0 : index
    %c0_7 = arith.constant 0 : index
    %10 = vector.load %arg4[%c0_6, %c0_7] : memref<2x32xf32, #tpu.memory_space<vmem>>, vector<1x32xf32>
    %c1 = arith.constant 1 : index
    %c0_8 = arith.constant 0 : index
    %11 = vector.load %arg4[%c1, %c0_8] : memref<2x32xf32, #tpu.memory_space<vmem>>, vector<1x32xf32>
    %c0_9 = arith.constant 0 : index
    %c0_10 = arith.constant 0 : index
    %12 = vector.load %arg5[%c0_9, %c0_10] : memref<1x32xf32, #tpu.memory_space<vmem>>, vector<1x32xf32>
    %c0_11 = arith.constant 0 : index
    %c0_12 = arith.constant 0 : index
    %13 = vector.load %arg6[%c0_11, %c0_12] : memref<32x32xf32, #tpu.memory_space<vmem>>, vector<32x32xf32>
    %cst_13 = arith.constant dense<0.000000e+00> : vector<6x32xf32>
    %14 = tpu.matmul %9, %13, %cst_13 {dimension_numbers = #tpu.dot_dimension_numbers<[1], [0], [0], [1], [0, 0, 1, 1], [], []>} : vector<6x32xf32>, vector<32x32xf32>, vector<6x32xf32> -> vector<6x32xf32>
    %15 = vector.extract_strided_slice %2 {offsets = [0, 0], sizes = [6, 1], strides = [1, 1]} : vector<6x6xf32> to vector<6x1xf32>
    %16 = vector.extract_strided_slice %2 {offsets = [0, 1], sizes = [6, 1], strides = [1, 1]} : vector<6x6xf32> to vector<6x1xf32>
    %17 = vector.broadcast %15 : vector<6x1xf32> to vector<6x32xf32>
    %18 = vector.broadcast %10 : vector<1x32xf32> to vector<6x32xf32>
    %19 = arith.mulf %17, %18 : vector<6x32xf32>
    %20 = vector.broadcast %16 : vector<6x1xf32> to vector<6x32xf32>
    %21 = vector.broadcast %11 : vector<1x32xf32> to vector<6x32xf32>
    %22 = arith.mulf %20, %21 : vector<6x32xf32>
    %23 = arith.addf %19, %22 : vector<6x32xf32>
    %24 = vector.broadcast %12 : vector<1x32xf32> to vector<6x32xf32>
    %25 = arith.addf %23, %24 : vector<6x32xf32>
    %cst_14 = arith.constant 0.000000e+00 : f32
    %26 = vector.broadcast %cst_14 : f32 to vector<6x32xf32>
    %27 = arith.maximumf %25, %26 : vector<6x32xf32>
    %c0_15 = arith.constant 0 : index
    %c0_16 = arith.constant 0 : index
    %28 = vector.load %arg7[%c0_15, %c0_16] : memref<32x64xf32, #tpu.memory_space<vmem>>, vector<32x64xf32>
    %cst_17 = arith.constant dense<0.000000e+00> : vector<6x64xf32>
    %29 = tpu.matmul %27, %28, %cst_17 {dimension_numbers = #tpu.dot_dimension_numbers<[1], [0], [0], [1], [0, 0, 1, 1], [], []>} : vector<6x32xf32>, vector<32x64xf32>, vector<6x64xf32> -> vector<6x64xf32>
    %30 = vector.extract_strided_slice %29 {offsets = [0, 0], sizes = [6, 32], strides = [1, 1]} : vector<6x64xf32> to vector<6x32xf32>
    %31 = vector.extract_strided_slice %29 {offsets = [0, 32], sizes = [6, 32], strides = [1, 1]} : vector<6x64xf32> to vector<6x32xf32>
    %32 = arith.mulf %14, %30 : vector<6x32xf32>
    %cst_18 = arith.constant dense<0.000000e+00> : vector<6xf32>
    %33 = vector.multi_reduction <add>, %32, %cst_18 [1] : vector<6x32xf32> to vector<6xf32>
    %34 = vector.shape_cast %33 : vector<6xf32> to vector<6x1xf32>
    %cst_19 = arith.constant 0.176776692 : f32
    %35 = vector.broadcast %cst_19 : f32 to vector<6x1xf32>
    %36 = arith.mulf %35, %34 : vector<6x1xf32>
    %37 = vector.extract_strided_slice %2 {offsets = [0, 2], sizes = [6, 1], strides = [1, 1]} : vector<6x6xf32> to vector<6x1xf32>
    %38 = vector.extract_strided_slice %2 {offsets = [0, 3], sizes = [6, 1], strides = [1, 1]} : vector<6x6xf32> to vector<6x1xf32>
    %39 = vector.broadcast %37 : vector<6x1xf32> to vector<6x32xf32>
    %40 = vector.broadcast %10 : vector<1x32xf32> to vector<6x32xf32>
    %41 = arith.mulf %39, %40 : vector<6x32xf32>
    %42 = vector.broadcast %38 : vector<6x1xf32> to vector<6x32xf32>
    %43 = vector.broadcast %11 : vector<1x32xf32> to vector<6x32xf32>
    %44 = arith.mulf %42, %43 : vector<6x32xf32>
    %45 = arith.addf %41, %44 : vector<6x32xf32>
    %46 = vector.broadcast %12 : vector<1x32xf32> to vector<6x32xf32>
    %47 = arith.addf %45, %46 : vector<6x32xf32>
    %cst_20 = arith.constant 0.000000e+00 : f32
    %48 = vector.broadcast %cst_20 : f32 to vector<6x32xf32>
    %49 = arith.maximumf %47, %48 : vector<6x32xf32>
    %c0_21 = arith.constant 0 : index
    %c0_22 = arith.constant 0 : index
    %50 = vector.load %arg7[%c0_21, %c0_22] : memref<32x64xf32, #tpu.memory_space<vmem>>, vector<32x64xf32>
    %cst_23 = arith.constant dense<0.000000e+00> : vector<6x64xf32>
    %51 = tpu.matmul %49, %50, %cst_23 {dimension_numbers = #tpu.dot_dimension_numbers<[1], [0], [0], [1], [0, 0, 1, 1], [], []>} : vector<6x32xf32>, vector<32x64xf32>, vector<6x64xf32> -> vector<6x64xf32>
    %52 = vector.extract_strided_slice %51 {offsets = [0, 0], sizes = [6, 32], strides = [1, 1]} : vector<6x64xf32> to vector<6x32xf32>
    %53 = vector.extract_strided_slice %51 {offsets = [0, 32], sizes = [6, 32], strides = [1, 1]} : vector<6x64xf32> to vector<6x32xf32>
    %54 = arith.mulf %14, %52 : vector<6x32xf32>
    %cst_24 = arith.constant dense<0.000000e+00> : vector<6xf32>
    %55 = vector.multi_reduction <add>, %54, %cst_24 [1] : vector<6x32xf32> to vector<6xf32>
    %56 = vector.shape_cast %55 : vector<6xf32> to vector<6x1xf32>
    %cst_25 = arith.constant 0.176776692 : f32
    %57 = vector.broadcast %cst_25 : f32 to vector<6x1xf32>
    %58 = arith.mulf %57, %56 : vector<6x1xf32>
    %59 = vector.extract_strided_slice %2 {offsets = [0, 4], sizes = [6, 1], strides = [1, 1]} : vector<6x6xf32> to vector<6x1xf32>
    %60 = vector.extract_strided_slice %2 {offsets = [0, 5], sizes = [6, 1], strides = [1, 1]} : vector<6x6xf32> to vector<6x1xf32>
    %61 = vector.broadcast %59 : vector<6x1xf32> to vector<6x32xf32>
    %62 = vector.broadcast %10 : vector<1x32xf32> to vector<6x32xf32>
    %63 = arith.mulf %61, %62 : vector<6x32xf32>
    %64 = vector.broadcast %60 : vector<6x1xf32> to vector<6x32xf32>
    %65 = vector.broadcast %11 : vector<1x32xf32> to vector<6x32xf32>
    %66 = arith.mulf %64, %65 : vector<6x32xf32>
    %67 = arith.addf %63, %66 : vector<6x32xf32>
    %68 = vector.broadcast %12 : vector<1x32xf32> to vector<6x32xf32>
    %69 = arith.addf %67, %68 : vector<6x32xf32>
    %cst_26 = arith.constant 0.000000e+00 : f32
    %70 = vector.broadcast %cst_26 : f32 to vector<6x32xf32>
    %71 = arith.maximumf %69, %70 : vector<6x32xf32>
    %c0_27 = arith.constant 0 : index
    %c0_28 = arith.constant 0 : index
    %72 = vector.load %arg7[%c0_27, %c0_28] : memref<32x64xf32, #tpu.memory_space<vmem>>, vector<32x64xf32>
    %cst_29 = arith.constant dense<0.000000e+00> : vector<6x64xf32>
    %73 = tpu.matmul %71, %72, %cst_29 {dimension_numbers = #tpu.dot_dimension_numbers<[1], [0], [0], [1], [0, 0, 1, 1], [], []>} : vector<6x32xf32>, vector<32x64xf32>, vector<6x64xf32> -> vector<6x64xf32>
    %74 = vector.extract_strided_slice %73 {offsets = [0, 0], sizes = [6, 32], strides = [1, 1]} : vector<6x64xf32> to vector<6x32xf32>
    %75 = vector.extract_strided_slice %73 {offsets = [0, 32], sizes = [6, 32], strides = [1, 1]} : vector<6x64xf32> to vector<6x32xf32>
    %76 = arith.mulf %14, %74 : vector<6x32xf32>
    %cst_30 = arith.constant dense<0.000000e+00> : vector<6xf32>
    %77 = vector.multi_reduction <add>, %76, %cst_30 [1] : vector<6x32xf32> to vector<6xf32>
    %78 = vector.shape_cast %77 : vector<6xf32> to vector<6x1xf32>
    %cst_31 = arith.constant 0.176776692 : f32
    %79 = vector.broadcast %cst_31 : f32 to vector<6x1xf32>
    %80 = arith.mulf %79, %78 : vector<6x1xf32>
    %81 = arith.maximumf %36, %58 : vector<6x1xf32>
    %82 = arith.maximumf %81, %80 : vector<6x1xf32>
    %83 = arith.subf %36, %82 : vector<6x1xf32>
    %84 = math.exp %83 : vector<6x1xf32>
    %85 = vector.broadcast %84 : vector<6x1xf32> to vector<6x32xf32>
    %86 = arith.mulf %85, %31 : vector<6x32xf32>
    %87 = arith.subf %58, %82 : vector<6x1xf32>
    %88 = math.exp %87 : vector<6x1xf32>
    %89 = arith.addf %84, %88 : vector<6x1xf32>
    %90 = vector.broadcast %88 : vector<6x1xf32> to vector<6x32xf32>
    %91 = arith.mulf %90, %53 : vector<6x32xf32>
    %92 = arith.addf %86, %91 : vector<6x32xf32>
    %93 = arith.subf %80, %82 : vector<6x1xf32>
    %94 = math.exp %93 : vector<6x1xf32>
    %95 = arith.addf %89, %94 : vector<6x1xf32>
    %96 = vector.broadcast %94 : vector<6x1xf32> to vector<6x32xf32>
    %97 = arith.mulf %96, %75 : vector<6x32xf32>
    %98 = arith.addf %92, %97 : vector<6x32xf32>
    %99 = tpu.reciprocal %95 {approx = true} : vector<6x1xf32> -> vector<6x1xf32>
    %100 = vector.broadcast %99 : vector<6x1xf32> to vector<6x32xf32>
    %101 = arith.mulf %98, %100 : vector<6x32xf32>
    %c0_32 = arith.constant 0 : index
    %c0_33 = arith.constant 0 : index
    %102 = vector.load %arg8[%c0_32, %c0_33] : memref<32x32xf32, #tpu.memory_space<vmem>>, vector<32x32xf32>
    %cst_34 = arith.constant dense<0.000000e+00> : vector<6x32xf32>
    %103 = tpu.matmul %101, %102, %cst_34 {dimension_numbers = #tpu.dot_dimension_numbers<[1], [0], [0], [1], [0, 0, 1, 1], [], []>} : vector<6x32xf32>, vector<32x32xf32>, vector<6x32xf32> -> vector<6x32xf32>
    %c0_35 = arith.constant 0 : index
    %c0_36 = arith.constant 0 : index
    %104 = vector.load %arg9[%c0_35, %c0_36] : memref<32x32xf32, #tpu.memory_space<vmem>>, vector<32x32xf32>
    %cst_37 = arith.constant dense<0.000000e+00> : vector<6x32xf32>
    %105 = tpu.matmul %9, %104, %cst_37 {dimension_numbers = #tpu.dot_dimension_numbers<[1], [0], [0], [1], [0, 0, 1, 1], [], []>} : vector<6x32xf32>, vector<32x32xf32>, vector<6x32xf32> -> vector<6x32xf32>
    %c0_38 = arith.constant 0 : index
    %c0_39 = arith.constant 0 : index
    %106 = vector.load %arg10[%c0_38, %c0_39] : memref<32x32xf32, #tpu.memory_space<vmem>>, vector<32x32xf32>
    %cst_40 = arith.constant dense<0.000000e+00> : vector<6x32xf32>
    %107 = tpu.matmul %103, %106, %cst_40 {dimension_numbers = #tpu.dot_dimension_numbers<[1], [0], [0], [1], [0, 0, 1, 1], [], []>} : vector<6x32xf32>, vector<32x32xf32>, vector<6x32xf32> -> vector<6x32xf32>
    %108 = arith.addf %105, %107 : vector<6x32xf32>
    %c0_41 = arith.constant 0 : index
    %c0_42 = arith.constant 0 : index
    %109 = vector.load %arg11[%c0_41, %c0_42] : memref<1x32xf32, #tpu.memory_space<vmem>>, vector<1x32xf32>
    %110 = vector.broadcast %109 : vector<1x32xf32> to vector<6x32xf32>
    %111 = arith.addf %108, %110 : vector<6x32xf32>
    %cst_43 = arith.constant 0.000000e+00 : f32
    %112 = vector.broadcast %cst_43 : f32 to vector<6x32xf32>
    %113 = arith.maximumf %111, %112 : vector<6x32xf32>
    %c0_44 = arith.constant 0 : index
    %c0_45 = arith.constant 0 : index
    %114 = vector.load %arg1[%c0_44, %c0_45] : memref<6x6xf32, #tpu.memory_space<vmem>>, vector<6x6xf32>
    %c0_46 = arith.constant 0 : index
    %c0_47 = arith.constant 0 : index
    %115 = vector.load %arg12[%c0_46, %c0_47] : memref<32x96xf32, #tpu.memory_space<vmem>>, vector<32x96xf32>
    %cst_48 = arith.constant dense<0.000000e+00> : vector<6x96xf32>
    %116 = tpu.matmul %113, %115, %cst_48 {dimension_numbers = #tpu.dot_dimension_numbers<[1], [0], [0], [1], [0, 0, 1, 1], [], []>} : vector<6x32xf32>, vector<32x96xf32>, vector<6x96xf32> -> vector<6x96xf32>
    %117 = vector.extract_strided_slice %116 {offsets = [0, 0], sizes = [6, 32], strides = [1, 1]} : vector<6x96xf32> to vector<6x32xf32>
    %118 = vector.extract_strided_slice %116 {offsets = [0, 32], sizes = [6, 32], strides = [1, 1]} : vector<6x96xf32> to vector<6x32xf32>
    %119 = vector.extract_strided_slice %116 {offsets = [0, 64], sizes = [6, 32], strides = [1, 1]} : vector<6x96xf32> to vector<6x32xf32>
    %cst_49 = arith.constant dense<0.000000e+00> : vector<6x6xf32>
    %120 = tpu.matmul %117, %118, %cst_49 {dimension_numbers = #tpu.dot_dimension_numbers<[1], [1], [0], [0], [0, 0, 1, 0], [], []>} : vector<6x32xf32>, vector<6x32xf32>, vector<6x6xf32> -> vector<6x6xf32>
    %cst_50 = arith.constant 0.176776692 : f32
    %121 = vector.broadcast %cst_50 : f32 to vector<6x6xf32>
    %122 = arith.mulf %121, %120 : vector<6x6xf32>
    %123 = arith.addf %122, %114 : vector<6x6xf32>
    %cst_51 = arith.constant dense<0xFF800000> : vector<6xf32>
    %124 = vector.multi_reduction <maximumf>, %123, %cst_51 [1] : vector<6x6xf32> to vector<6xf32>
    %125 = vector.shape_cast %124 : vector<6xf32> to vector<6x1xf32>
    %126 = vector.broadcast %125 : vector<6x1xf32> to vector<6x6xf32>
    %127 = arith.subf %123, %126 : vector<6x6xf32>
    %128 = math.exp %127 : vector<6x6xf32>
    %cst_52 = arith.constant dense<0.000000e+00> : vector<6xf32>
    %129 = vector.multi_reduction <add>, %128, %cst_52 [1] : vector<6x6xf32> to vector<6xf32>
    %130 = vector.shape_cast %129 : vector<6xf32> to vector<6x1xf32>
    %131 = tpu.reciprocal %130 {approx = true} : vector<6x1xf32> -> vector<6x1xf32>
    %132 = vector.broadcast %131 : vector<6x1xf32> to vector<6x6xf32>
    %133 = arith.mulf %128, %132 : vector<6x6xf32>
    %cst_53 = arith.constant dense<0.000000e+00> : vector<6x32xf32>
    %134 = tpu.matmul %133, %119, %cst_53 {dimension_numbers = #tpu.dot_dimension_numbers<[1], [0], [0], [1], [0, 0, 1, 1], [], []>} : vector<6x6xf32>, vector<6x32xf32>, vector<6x32xf32> -> vector<6x32xf32>
    %c0_54 = arith.constant 0 : index
    %c0_55 = arith.constant 0 : index
    %135 = vector.load %arg13[%c0_54, %c0_55] : memref<32x32xf32, #tpu.memory_space<vmem>>, vector<32x32xf32>
    %cst_56 = arith.constant dense<0.000000e+00> : vector<6x32xf32>
    %136 = tpu.matmul %134, %135, %cst_56 {dimension_numbers = #tpu.dot_dimension_numbers<[1], [0], [0], [1], [0, 0, 1, 1], [], []>} : vector<6x32xf32>, vector<32x32xf32>, vector<6x32xf32> -> vector<6x32xf32>
    %c0_57 = arith.constant 0 : index
    %c0_58 = arith.constant 0 : index
    %137 = vector.load %arg14[%c0_57, %c0_58] : memref<32x32xf32, #tpu.memory_space<vmem>>, vector<32x32xf32>
    %cst_59 = arith.constant dense<0.000000e+00> : vector<6x32xf32>
    %138 = tpu.matmul %113, %137, %cst_59 {dimension_numbers = #tpu.dot_dimension_numbers<[1], [0], [0], [1], [0, 0, 1, 1], [], []>} : vector<6x32xf32>, vector<32x32xf32>, vector<6x32xf32> -> vector<6x32xf32>
    %c0_60 = arith.constant 0 : index
    %c0_61 = arith.constant 0 : index
    %139 = vector.load %arg15[%c0_60, %c0_61] : memref<32x32xf32, #tpu.memory_space<vmem>>, vector<32x32xf32>
    %cst_62 = arith.constant dense<0.000000e+00> : vector<6x32xf32>
    %140 = tpu.matmul %136, %139, %cst_62 {dimension_numbers = #tpu.dot_dimension_numbers<[1], [0], [0], [1], [0, 0, 1, 1], [], []>} : vector<6x32xf32>, vector<32x32xf32>, vector<6x32xf32> -> vector<6x32xf32>
    %141 = arith.addf %138, %140 : vector<6x32xf32>
    %c0_63 = arith.constant 0 : index
    %c0_64 = arith.constant 0 : index
    %142 = vector.load %arg16[%c0_63, %c0_64] : memref<1x32xf32, #tpu.memory_space<vmem>>, vector<1x32xf32>
    %143 = vector.broadcast %142 : vector<1x32xf32> to vector<6x32xf32>
    %144 = arith.addf %141, %143 : vector<6x32xf32>
    %cst_65 = arith.constant 0.000000e+00 : f32
    %145 = vector.broadcast %cst_65 : f32 to vector<6x32xf32>
    %146 = arith.maximumf %144, %145 : vector<6x32xf32>
    %c0_66 = arith.constant 0 : index
    %c0_67 = arith.constant 0 : index
    %147 = vector.load %arg12[%c0_66, %c0_67] : memref<32x96xf32, #tpu.memory_space<vmem>>, vector<32x96xf32>
    %cst_68 = arith.constant dense<0.000000e+00> : vector<6x96xf32>
    %148 = tpu.matmul %146, %147, %cst_68 {dimension_numbers = #tpu.dot_dimension_numbers<[1], [0], [0], [1], [0, 0, 1, 1], [], []>} : vector<6x32xf32>, vector<32x96xf32>, vector<6x96xf32> -> vector<6x96xf32>
    %149 = vector.extract_strided_slice %148 {offsets = [0, 0], sizes = [6, 32], strides = [1, 1]} : vector<6x96xf32> to vector<6x32xf32>
    %150 = vector.extract_strided_slice %148 {offsets = [0, 32], sizes = [6, 32], strides = [1, 1]} : vector<6x96xf32> to vector<6x32xf32>
    %151 = vector.extract_strided_slice %148 {offsets = [0, 64], sizes = [6, 32], strides = [1, 1]} : vector<6x96xf32> to vector<6x32xf32>
    %cst_69 = arith.constant dense<0.000000e+00> : vector<6x6xf32>
    %152 = tpu.matmul %149, %150, %cst_69 {dimension_numbers = #tpu.dot_dimension_numbers<[1], [1], [0], [0], [0, 0, 1, 0], [], []>} : vector<6x32xf32>, vector<6x32xf32>, vector<6x6xf32> -> vector<6x6xf32>
    %cst_70 = arith.constant 0.176776692 : f32
    %153 = vector.broadcast %cst_70 : f32 to vector<6x6xf32>
    %154 = arith.mulf %153, %152 : vector<6x6xf32>
    %155 = arith.addf %154, %114 : vector<6x6xf32>
    %cst_71 = arith.constant dense<0xFF800000> : vector<6xf32>
    %156 = vector.multi_reduction <maximumf>, %155, %cst_71 [1] : vector<6x6xf32> to vector<6xf32>
    %157 = vector.shape_cast %156 : vector<6xf32> to vector<6x1xf32>
    %158 = vector.broadcast %157 : vector<6x1xf32> to vector<6x6xf32>
    %159 = arith.subf %155, %158 : vector<6x6xf32>
    %160 = math.exp %159 : vector<6x6xf32>
    %cst_72 = arith.constant dense<0.000000e+00> : vector<6xf32>
    %161 = vector.multi_reduction <add>, %160, %cst_72 [1] : vector<6x6xf32> to vector<6xf32>
    %162 = vector.shape_cast %161 : vector<6xf32> to vector<6x1xf32>
    %163 = tpu.reciprocal %162 {approx = true} : vector<6x1xf32> -> vector<6x1xf32>
    %164 = vector.broadcast %163 : vector<6x1xf32> to vector<6x6xf32>
    %165 = arith.mulf %160, %164 : vector<6x6xf32>
    %cst_73 = arith.constant dense<0.000000e+00> : vector<6x32xf32>
    %166 = tpu.matmul %165, %151, %cst_73 {dimension_numbers = #tpu.dot_dimension_numbers<[1], [0], [0], [1], [0, 0, 1, 1], [], []>} : vector<6x6xf32>, vector<6x32xf32>, vector<6x32xf32> -> vector<6x32xf32>
    %c0_74 = arith.constant 0 : index
    %c0_75 = arith.constant 0 : index
    %167 = vector.load %arg13[%c0_74, %c0_75] : memref<32x32xf32, #tpu.memory_space<vmem>>, vector<32x32xf32>
    %cst_76 = arith.constant dense<0.000000e+00> : vector<6x32xf32>
    %168 = tpu.matmul %166, %167, %cst_76 {dimension_numbers = #tpu.dot_dimension_numbers<[1], [0], [0], [1], [0, 0, 1, 1], [], []>} : vector<6x32xf32>, vector<32x32xf32>, vector<6x32xf32> -> vector<6x32xf32>
    %c0_77 = arith.constant 0 : index
    %c0_78 = arith.constant 0 : index
    %169 = vector.load %arg14[%c0_77, %c0_78] : memref<32x32xf32, #tpu.memory_space<vmem>>, vector<32x32xf32>
    %cst_79 = arith.constant dense<0.000000e+00> : vector<6x32xf32>
    %170 = tpu.matmul %146, %169, %cst_79 {dimension_numbers = #tpu.dot_dimension_numbers<[1], [0], [0], [1], [0, 0, 1, 1], [], []>} : vector<6x32xf32>, vector<32x32xf32>, vector<6x32xf32> -> vector<6x32xf32>
    %c0_80 = arith.constant 0 : index
    %c0_81 = arith.constant 0 : index
    %171 = vector.load %arg15[%c0_80, %c0_81] : memref<32x32xf32, #tpu.memory_space<vmem>>, vector<32x32xf32>
    %cst_82 = arith.constant dense<0.000000e+00> : vector<6x32xf32>
    %172 = tpu.matmul %168, %171, %cst_82 {dimension_numbers = #tpu.dot_dimension_numbers<[1], [0], [0], [1], [0, 0, 1, 1], [], []>} : vector<6x32xf32>, vector<32x32xf32>, vector<6x32xf32> -> vector<6x32xf32>
    %173 = arith.addf %170, %172 : vector<6x32xf32>
    %c0_83 = arith.constant 0 : index
    %c0_84 = arith.constant 0 : index
    %174 = vector.load %arg16[%c0_83, %c0_84] : memref<1x32xf32, #tpu.memory_space<vmem>>, vector<1x32xf32>
    %175 = vector.broadcast %174 : vector<1x32xf32> to vector<6x32xf32>
    %176 = arith.addf %173, %175 : vector<6x32xf32>
    %cst_85 = arith.constant 0.000000e+00 : f32
    %177 = vector.broadcast %cst_85 : f32 to vector<6x32xf32>
    %178 = arith.maximumf %176, %177 : vector<6x32xf32>
    %c0_86 = arith.constant 0 : index
    %c0_87 = arith.constant 0 : index
    %179 = vector.load %arg12[%c0_86, %c0_87] : memref<32x96xf32, #tpu.memory_space<vmem>>, vector<32x96xf32>
    %cst_88 = arith.constant dense<0.000000e+00> : vector<6x96xf32>
    %180 = tpu.matmul %178, %179, %cst_88 {dimension_numbers = #tpu.dot_dimension_numbers<[1], [0], [0], [1], [0, 0, 1, 1], [], []>} : vector<6x32xf32>, vector<32x96xf32>, vector<6x96xf32> -> vector<6x96xf32>
    %181 = vector.extract_strided_slice %180 {offsets = [0, 0], sizes = [6, 32], strides = [1, 1]} : vector<6x96xf32> to vector<6x32xf32>
    %182 = vector.extract_strided_slice %180 {offsets = [0, 32], sizes = [6, 32], strides = [1, 1]} : vector<6x96xf32> to vector<6x32xf32>
    %183 = vector.extract_strided_slice %180 {offsets = [0, 64], sizes = [6, 32], strides = [1, 1]} : vector<6x96xf32> to vector<6x32xf32>
    %cst_89 = arith.constant dense<0.000000e+00> : vector<6x6xf32>
    %184 = tpu.matmul %181, %182, %cst_89 {dimension_numbers = #tpu.dot_dimension_numbers<[1], [1], [0], [0], [0, 0, 1, 0], [], []>} : vector<6x32xf32>, vector<6x32xf32>, vector<6x6xf32> -> vector<6x6xf32>
    %cst_90 = arith.constant 0.176776692 : f32
    %185 = vector.broadcast %cst_90 : f32 to vector<6x6xf32>
    %186 = arith.mulf %185, %184 : vector<6x6xf32>
    %187 = arith.addf %186, %114 : vector<6x6xf32>
    %cst_91 = arith.constant dense<0xFF800000> : vector<6xf32>
    %188 = vector.multi_reduction <maximumf>, %187, %cst_91 [1] : vector<6x6xf32> to vector<6xf32>
    %189 = vector.shape_cast %188 : vector<6xf32> to vector<6x1xf32>
    %190 = vector.broadcast %189 : vector<6x1xf32> to vector<6x6xf32>
    %191 = arith.subf %187, %190 : vector<6x6xf32>
    %192 = math.exp %191 : vector<6x6xf32>
    %cst_92 = arith.constant dense<0.000000e+00> : vector<6xf32>
    %193 = vector.multi_reduction <add>, %192, %cst_92 [1] : vector<6x6xf32> to vector<6xf32>
    %194 = vector.shape_cast %193 : vector<6xf32> to vector<6x1xf32>
    %195 = tpu.reciprocal %194 {approx = true} : vector<6x1xf32> -> vector<6x1xf32>
    %196 = vector.broadcast %195 : vector<6x1xf32> to vector<6x6xf32>
    %197 = arith.mulf %192, %196 : vector<6x6xf32>
    %cst_93 = arith.constant dense<0.000000e+00> : vector<6x32xf32>
    %198 = tpu.matmul %197, %183, %cst_93 {dimension_numbers = #tpu.dot_dimension_numbers<[1], [0], [0], [1], [0, 0, 1, 1], [], []>} : vector<6x6xf32>, vector<6x32xf32>, vector<6x32xf32> -> vector<6x32xf32>
    %c0_94 = arith.constant 0 : index
    %c0_95 = arith.constant 0 : index
    %199 = vector.load %arg13[%c0_94, %c0_95] : memref<32x32xf32, #tpu.memory_space<vmem>>, vector<32x32xf32>
    %cst_96 = arith.constant dense<0.000000e+00> : vector<6x32xf32>
    %200 = tpu.matmul %198, %199, %cst_96 {dimension_numbers = #tpu.dot_dimension_numbers<[1], [0], [0], [1], [0, 0, 1, 1], [], []>} : vector<6x32xf32>, vector<32x32xf32>, vector<6x32xf32> -> vector<6x32xf32>
    %c0_97 = arith.constant 0 : index
    %c0_98 = arith.constant 0 : index
    %201 = vector.load %arg14[%c0_97, %c0_98] : memref<32x32xf32, #tpu.memory_space<vmem>>, vector<32x32xf32>
    %cst_99 = arith.constant dense<0.000000e+00> : vector<6x32xf32>
    %202 = tpu.matmul %178, %201, %cst_99 {dimension_numbers = #tpu.dot_dimension_numbers<[1], [0], [0], [1], [0, 0, 1, 1], [], []>} : vector<6x32xf32>, vector<32x32xf32>, vector<6x32xf32> -> vector<6x32xf32>
    %c0_100 = arith.constant 0 : index
    %c0_101 = arith.constant 0 : index
    %203 = vector.load %arg15[%c0_100, %c0_101] : memref<32x32xf32, #tpu.memory_space<vmem>>, vector<32x32xf32>
    %cst_102 = arith.constant dense<0.000000e+00> : vector<6x32xf32>
    %204 = tpu.matmul %200, %203, %cst_102 {dimension_numbers = #tpu.dot_dimension_numbers<[1], [0], [0], [1], [0, 0, 1, 1], [], []>} : vector<6x32xf32>, vector<32x32xf32>, vector<6x32xf32> -> vector<6x32xf32>
    %205 = arith.addf %202, %204 : vector<6x32xf32>
    %c0_103 = arith.constant 0 : index
    %c0_104 = arith.constant 0 : index
    %206 = vector.load %arg16[%c0_103, %c0_104] : memref<1x32xf32, #tpu.memory_space<vmem>>, vector<1x32xf32>
    %207 = vector.broadcast %206 : vector<1x32xf32> to vector<6x32xf32>
    %208 = arith.addf %205, %207 : vector<6x32xf32>
    %cst_105 = arith.constant 0.000000e+00 : f32
    %209 = vector.broadcast %cst_105 : f32 to vector<6x32xf32>
    %210 = arith.maximumf %208, %209 : vector<6x32xf32>
    %c0_106 = arith.constant 0 : index
    %c0_107 = arith.constant 0 : index
    %211 = vector.load %arg17[%c0_106, %c0_107] : memref<32x32xf32, #tpu.memory_space<vmem>>, vector<32x32xf32>
    %cst_108 = arith.constant dense<0.000000e+00> : vector<6x32xf32>
    %212 = tpu.matmul %210, %211, %cst_108 {dimension_numbers = #tpu.dot_dimension_numbers<[1], [0], [0], [1], [0, 0, 1, 1], [], []>} : vector<6x32xf32>, vector<32x32xf32>, vector<6x32xf32> -> vector<6x32xf32>
    %c0_109 = arith.constant 0 : index
    %c0_110 = arith.constant 0 : index
    %213 = vector.load %arg18[%c0_109, %c0_110] : memref<1x32xf32, #tpu.memory_space<vmem>>, vector<1x32xf32>
    %214 = vector.broadcast %213 : vector<1x32xf32> to vector<6x32xf32>
    %215 = arith.addf %212, %214 : vector<6x32xf32>
    %cst_111 = arith.constant 0.000000e+00 : f32
    %216 = vector.broadcast %cst_111 : f32 to vector<6x32xf32>
    %217 = arith.cmpf oge, %215, %216 : vector<6x32xf32>
    %cst_112 = arith.constant 0.00999999977 : f32
    %218 = vector.broadcast %cst_112 : f32 to vector<6x32xf32>
    %219 = arith.mulf %218, %215 : vector<6x32xf32>
    %220 = arith.select %217, %215, %219 : vector<6x32xi1>, vector<6x32xf32>
    %c0_113 = arith.constant 0 : index
    %c0_114 = arith.constant 0 : index
    %221 = vector.load %arg19[%c0_113, %c0_114] : memref<32x2xf32, #tpu.memory_space<vmem>>, vector<32x2xf32>
    %cst_115 = arith.constant dense<0.000000e+00> : vector<6x2xf32>
    %222 = tpu.matmul %220, %221, %cst_115 {dimension_numbers = #tpu.dot_dimension_numbers<[1], [0], [0], [1], [0, 0, 1, 1], [], []>} : vector<6x32xf32>, vector<32x2xf32>, vector<6x2xf32> -> vector<6x2xf32>
    %c0_116 = arith.constant 0 : index
    %c0_117 = arith.constant 0 : index
    %223 = vector.load %arg20[%c0_116, %c0_117] : memref<1x2xf32, #tpu.memory_space<vmem>>, vector<1x2xf32>
    %224 = vector.broadcast %223 : vector<1x2xf32> to vector<6x2xf32>
    %225 = arith.addf %222, %224 : vector<6x2xf32>
    %226 = math.tanh %225 : vector<6x2xf32>
    %c0_118 = arith.constant 0 : index
    %c0_119 = arith.constant 0 : index
    %227 = vector.load %arg21[%c0_118, %c0_119] : memref<6x2xf32, #tpu.memory_space<vmem>>, vector<6x2xf32>
    tpu.vector_store %arg21[%c0_118, %c0_119], %226 {strides = array<i32>} : memref<6x2xf32, #tpu.memory_space<vmem>>, vector<6x2xf32>,
    return
  }
}

</mosaic_0001>

<llo_original>
// kernel: tpu_custom_call.1
$region0: #{tpu_custom_call.1}
  #allocation0 [shape = 'u32[]', space=smem, size = 0x4, offset = 0x4, fixed_abs, tag = 'smem constant byte address 0x4 - core index']
  #allocation1 [shape = 'u32[72,128]{1,0:T(1,128)}', space=vmem, size = 0x9000, scoped, tag = 'internal scratch']
  %s0 = inlined_call_operand.hbm [shape: f32[6,22], index: 0, kind: input, shape index: {}]
  %s1 = inlined_call_operand.hbm [shape: f32[6,6], index: 1, kind: input, shape index: {}]
  %s2 = inlined_call_operand.hbm [shape: f32[16,32], index: 2, kind: input, shape index: {}]
  %s3 = inlined_call_operand.vmem [shape: f32[1,32], index: 3, kind: input, shape index: {}]
  %s4 = inlined_call_operand.vmem [shape: f32[2,32], index: 4, kind: input, shape index: {}]
  %s5 = inlined_call_operand.vmem [shape: f32[1,32], index: 5, kind: input, shape index: {}]
  %s6 = inlined_call_operand.vmem [shape: f32[32,32], index: 6, kind: input, shape index: {}]
  %s7 = inlined_call_operand.hbm [shape: f32[32,64], index: 7, kind: input, shape index: {}]
  %s8 = inlined_call_operand.hbm [shape: f32[32,32], index: 8, kind: input, shape index: {}]
  %s9 = inlined_call_operand.hbm [shape: f32[32,32], index: 9, kind: input, shape index: {}]
  %s10 = inlined_call_operand.hbm [shape: f32[32,32], index: 10, kind: input, shape index: {}]
  %s11 = inlined_call_operand.vmem [shape: f32[1,32], index: 11, kind: input, shape index: {}]
  %s12 = inlined_call_operand.hbm [shape: f32[32,96], index: 12, kind: input, shape index: {}]
  %s13 = inlined_call_operand.hbm [shape: f32[32,32], index: 13, kind: input, shape index: {}]
  %s14 = inlined_call_operand.hbm [shape: f32[32,32], index: 14, kind: input, shape index: {}]
  %s15 = inlined_call_operand.hbm [shape: f32[32,32], index: 15, kind: input, shape index: {}]
  %s16 = inlined_call_operand.vmem [shape: f32[1,32], index: 16, kind: input, shape index: {}]
  %s17 = inlined_call_operand.hbm [shape: f32[32,32], index: 17, kind: input, shape index: {}]
  %s18 = inlined_call_operand.vmem [shape: f32[1,32], index: 18, kind: input, shape index: {}]
  %s19 = inlined_call_operand.vmem [shape: f32[32,2], index: 19, kind: input, shape index: {}]
  %s20 = inlined_call_operand.vmem [shape: f32[1,2], index: 20, kind: input, shape index: {}]
  %s21 = inlined_call_operand.vmem [shape: f32[6,2], index: 21, kind: output, shape index: {}]
  %s22 = sld [smem:[#allocation0]]
  $region142: #{tpu_custom_call.1} parent=0
    _
  %s24 = ssub.s32 1, %s22
  %s25 = scalar_select 0, %s24, %s22
  $region1: #{tpu_custom_call.1} parent=0
    #allocation2 [shape = 'u8[4096]{0}', space=vmem, size = 0x1000, scoped, tag = 'input window, operand 0, single buffered']
    #allocation3 [shape = 's32[1]{0}', space=sflag, size = 0x4, scoped, tag = 'scoped memory for tpu_custom_call.1']
    #allocation4 [shape = 'u8[4096]{0}', space=vmem, size = 0x1000, scoped, tag = 'input window, operand 1, single buffered']
    #allocation5 [shape = 's32[1]{0}', space=sflag, size = 0x4, scoped, tag = 'scoped memory for tpu_custom_call.1']
    #allocation6 [shape = 'u8[8192]{0}', space=vmem, size = 0x2000, scoped, tag = 'input window, operand 2, single buffered']
    #allocation7 [shape = 'u8[16384]{0}', space=vmem, size = 0x4000, scoped, tag = 'input window, operand 7, single buffered']
    #allocation8 [shape = 's32[1]{0}', space=sflag, size = 0x4, scoped, tag = 'scoped memory for tpu_custom_call.1']
    #allocation9 [shape = 'u8[16384]{0}', space=vmem, size = 0x4000, scoped, tag = 'input window, operand 8, single buffered']
    #allocation10 [shape = 'u8[16384]{0}', space=vmem, size = 0x4000, scoped, tag = 'input window, operand 9, single buffered']
    #allocation11 [shape = 's32[1]{0}', space=sflag, size = 0x4, scoped, tag = 'scoped memory for tpu_custom_call.1']
    #allocation12 [shape = 'u8[16384]{0}', space=vmem, size = 0x4000, scoped, tag = 'input window, operand 10, single buffered']
    #allocation13 [shape = 'u8[16384]{0}', space=vmem, size = 0x4000, scoped, tag = 'input window, operand 12, single buffered']
    #allocation14 [shape = 's32[1]{0}', space=sflag, size = 0x4, scoped, tag = 'scoped memory for tpu_custom_call.1']
    #allocation15 [shape = 'u8[16384]{0}', space=vmem, size = 0x4000, scoped, tag = 'input window, operand 13, single buffered']
    #allocation16 [shape = 'u8[16384]{0}', space=vmem, size = 0x4000, scoped, tag = 'input window, operand 14, single buffered']
    #allocation17 [shape = 's32[1]{0}', space=sflag, size = 0x4, scoped, tag = 'scoped memory for tpu_custom_call.1']
    #allocation18 [shape = 'u8[16384]{0}', space=vmem, size = 0x4000, scoped, tag = 'input window, operand 15, single buffered']
    #allocation19 [shape = 'u8[16384]{0}', space=vmem, size = 0x4000, scoped, tag = 'input window, operand 17, single buffered']
    #allocation20 [shape = 's32[1]{0}', space=sflag, size = 0x4, scoped, tag = 'scoped memory for tpu_custom_call.1']
    %26 = vsyncpa [#allocation3], 0
    %27 = vsyncpa [#allocation5], 0
    %28 = vsyncpa [#allocation8], 0
    %29 = vsyncpa [#allocation11], 0
    %30 = vsyncpa [#allocation14], 0
    %31 = vsyncpa [#allocation17], 0
    %32 = vsyncpa [#allocation20], 0
    // Predicated region
    $region2: #{tpu_custom_call.1} parent=1 // pred_check
      _
    $region3: #{tpu_custom_call.1} parent=1 // pred_check_branch
      %34 = sbr.rel (0) target = $region5
    $region4: #{tpu_custom_call.1} parent=1 // pred_region
      %36 = vsyncadd [#allocation3], 0
      %s38 = sshll.u32 %s0, 4
      %s39 = int_to_ptr.hbm [resolvable:$true] %s38
      %s40 = sshll.u32 [#allocation2], 4
      %s41 = int_to_ptr.vmem [resolvable:$true] %s40
      %43 = dma.hbm_to_vmem [thread:$0]  %s39, 128, %s41, [#allocation3]
    $region5: #{tpu_custom_call.1} parent=1 // pred_fallthru
      _
    // Predicated region
    $region6: #{tpu_custom_call.1} parent=1 // pred_check
      _
    $region7: #{tpu_custom_call.1} parent=1 // pred_check_branch
      %45 = sbr.rel (0) target = $region9
    $region8: #{tpu_custom_call.1} parent=1 // pred_region
      %47 = vsyncadd [#allocation5], 0
      %s49 = sshll.u32 %s1, 4
      %s50 = int_to_ptr.hbm [resolvable:$true] %s49
      %s51 = sshll.u32 [#allocation4], 4
      %s52 = int_to_ptr.vmem [resolvable:$true] %s51
      %54 = dma.hbm_to_vmem [thread:$0]  %s50, 128, %s52, [#allocation5]
    $region9: #{tpu_custom_call.1} parent=1 // pred_fallthru
      _
    // Predicated region
    $region10: #{tpu_custom_call.1} parent=1 // pred_check
      _
    $region11: #{tpu_custom_call.1} parent=1 // pred_check_branch
      %56 = sbr.rel (0) target = $region13
    $region12: #{tpu_custom_call.1} parent=1 // pred_region
      %58 = vsyncadd [#allocation5], 0
      %s59 = sshll.u32 %s2, 4
      %s60 = int_to_ptr.hbm [resolvable:$true] %s59
      %s61 = sshll.u32 [#allocation6], 4
      %s62 = int_to_ptr.vmem [resolvable:$true] %s61
      %67 = dma.hbm_to_vmem [thread:$0]  %s60, 256, %s62, [#allocation5], 128, 128, 8
    $region13: #{tpu_custom_call.1} parent=1 // pred_fallthru
      _
    // Predicated region
    $region14: #{tpu_custom_call.1} parent=1 // pred_check
      _
    $region15: #{tpu_custom_call.1} parent=1 // pred_check_branch
      %69 = sbr.rel (0) target = $region17
    $region16: #{tpu_custom_call.1} parent=1 // pred_region
      _
    $region17: #{tpu_custom_call.1} parent=1 // pred_fallthru
      _
    // Predicated region
    $region18: #{tpu_custom_call.1} parent=1 // pred_check
      _
    $region19: #{tpu_custom_call.1} parent=1 // pred_check_branch
      %71 = sbr.rel (0) target = $region21
    $region20: #{tpu_custom_call.1} parent=1 // pred_region
      _
    $region21: #{tpu_custom_call.1} parent=1 // pred_fallthru
      _
    // Predicated region
    $region22: #{tpu_custom_call.1} parent=1 // pred_check
      _
    $region23: #{tpu_custom_call.1} parent=1 // pred_check_branch
      %73 = sbr.rel (0) target = $region25
    $region24: #{tpu_custom_call.1} parent=1 // pred_region
      _
    $region25: #{tpu_custom_call.1} parent=1 // pred_fallthru
      _
    // Predicated region
    $region26: #{tpu_custom_call.1} parent=1 // pred_check
      _
    $region27: #{tpu_custom_call.1} parent=1 // pred_check_branch
      %75 = sbr.rel (0) target = $region29
    $region28: #{tpu_custom_call.1} parent=1 // pred_region
      _
    $region29: #{tpu_custom_call.1} parent=1 // pred_fallthru
      _
    // Predicated region
    $region30: #{tpu_custom_call.1} parent=1 // pred_check
      _
    $region31: #{tpu_custom_call.1} parent=1 // pred_check_branch
      %77 = sbr.rel (0) target = $region33
    $region32: #{tpu_custom_call.1} parent=1 // pred_region
      %79 = vsyncadd [#allocation8], 0
      %s80 = sshll.u32 %s7, 4
      %s81 = int_to_ptr.hbm [resolvable:$true] %s80
      %s82 = sshll.u32 [#allocation7], 4
      %s83 = int_to_ptr.vmem [resolvable:$true] %s82
      %88 = dma.hbm_to_vmem [thread:$0]  %s81, 512, %s83, [#allocation8], 128, 128, 8
    $region33: #{tpu_custom_call.1} parent=1 // pred_fallthru
      _
    // Predicated region
    $region34: #{tpu_custom_call.1} parent=1 // pred_check
      _
    $region35: #{tpu_custom_call.1} parent=1 // pred_check_branch
      %90 = sbr.rel (0) target = $region37
    $region36: #{tpu_custom_call.1} parent=1 // pred_region
      %92 = vsyncadd [#allocation8], 0
      %s93 = sshll.u32 %s8, 4
      %s94 = int_to_ptr.hbm [resolvable:$true] %s93
      %s95 = sshll.u32 [#allocation9], 4
      %s96 = int_to_ptr.vmem [resolvable:$true] %s95
      %101 = dma.hbm_to_vmem [thread:$0]  %s94, 512, %s96, [#allocation8], 128, 128, 8
    $region37: #{tpu_custom_call.1} parent=1 // pred_fallthru
      _
    // Predicated region
    $region38: #{tpu_custom_call.1} parent=1 // pred_check
      _
    $region39: #{tpu_custom_call.1} parent=1 // pred_check_branch
      %103 = sbr.rel (0) target = $region41
    $region40: #{tpu_custom_call.1} parent=1 // pred_region
      %105 = vsyncadd [#allocation11], 0
      %s106 = sshll.u32 %s9, 4
      %s107 = int_to_ptr.hbm [resolvable:$true] %s106
      %s108 = sshll.u32 [#allocation10], 4
      %s109 = int_to_ptr.vmem [resolvable:$true] %s108
      %114 = dma.hbm_to_vmem [thread:$0]  %s107, 512, %s109, [#allocation11], 128, 128, 8
    $region41: #{tpu_custom_call.1} parent=1 // pred_fallthru
      _
    // Predicated region
    $region42: #{tpu_custom_call.1} parent=1 // pred_check
      _
    $region43: #{tpu_custom_call.1} parent=1 // pred_check_branch
      %116 = sbr.rel (0) target = $region45
    $region44: #{tpu_custom_call.1} parent=1 // pred_region
      %118 = vsyncadd [#allocation11], 0
      %s119 = sshll.u32 %s10, 4
      %s120 = int_to_ptr.hbm [resolvable:$true] %s119
      %s121 = sshll.u32 [#allocation12], 4
      %s122 = int_to_ptr.vmem [resolvable:$true] %s121
      %127 = dma.hbm_to_vmem [thread:$0]  %s120, 512, %s122, [#allocation11], 128, 128, 8
    $region45: #{tpu_custom_call.1} parent=1 // pred_fallthru
      _
    // Predicated region
    $region46: #{tpu_custom_call.1} parent=1 // pred_check
      _
    $region47: #{tpu_custom_call.1} parent=1 // pred_check_branch
      %129 = sbr.rel (0) target = $region49
    $region48: #{tpu_custom_call.1} parent=1 // pred_region
      _
    $region49: #{tpu_custom_call.1} parent=1 // pred_fallthru
      _
    // Predicated region
    $region50: #{tpu_custom_call.1} parent=1 // pred_check
      _
    $region51: #{tpu_custom_call.1} parent=1 // pred_check_branch
      %131 = sbr.rel (0) target = $region53
    $region52: #{tpu_custom_call.1} parent=1 // pred_region
      %133 = vsyncadd [#allocation14], 0
      %s134 = sshll.u32 %s12, 4
      %s135 = int_to_ptr.hbm [resolvable:$true] %s134
      %s136 = sshll.u32 [#allocation13], 4
      %s137 = int_to_ptr.vmem [resolvable:$true] %s136
      %142 = dma.hbm_to_vmem [thread:$0]  %s135, 512, %s137, [#allocation14], 128, 128, 8
    $region53: #{tpu_custom_call.1} parent=1 // pred_fallthru
      _
    // Predicated region
    $region54: #{tpu_custom_call.1} parent=1 // pred_check
      _
    $region55: #{tpu_custom_call.1} parent=1 // pred_check_branch
      %144 = sbr.rel (0) target = $region57
    $region56: #{tpu_custom_call.1} parent=1 // pred_region
      %146 = vsyncadd [#allocation14], 0
      %s147 = sshll.u32 %s13, 4
      %s148 = int_to_ptr.hbm [resolvable:$true] %s147
      %s149 = sshll.u32 [#allocation15], 4
      %s150 = int_to_ptr.vmem [resolvable:$true] %s149
      %155 = dma.hbm_to_vmem [thread:$0]  %s148, 512, %s150, [#allocation14], 128, 128, 8
    $region57: #{tpu_custom_call.1} parent=1 // pred_fallthru
      _
    // Predicated region
    $region58: #{tpu_custom_call.1} parent=1 // pred_check
      _
    $region59: #{tpu_custom_call.1} parent=1 // pred_check_branch
      %157 = sbr.rel (0) target = $region61
    $region60: #{tpu_custom_call.1} parent=1 // pred_region
      %159 = vsyncadd [#allocation17], 0
      %s160 = sshll.u32 %s14, 4
      %s161 = int_to_ptr.hbm [resolvable:$true] %s160
      %s162 = sshll.u32 [#allocation16], 4
      %s163 = int_to_ptr.vmem [resolvable:$true] %s162
      %168 = dma.hbm_to_vmem [thread:$0]  %s161, 512, %s163, [#allocation17], 128, 128, 8
    $region61: #{tpu_custom_call.1} parent=1 // pred_fallthru
      _
    // Predicated region
    $region62: #{tpu_custom_call.1} parent=1 // pred_check
      _
    $region63: #{tpu_custom_call.1} parent=1 // pred_check_branch
      %170 = sbr.rel (0) target = $region65
    $region64: #{tpu_custom_call.1} parent=1 // pred_region
      %172 = vsyncadd [#allocation17], 0
      %s173 = sshll.u32 %s15, 4
      %s174 = int_to_ptr.hbm [resolvable:$true] %s173
      %s175 = sshll.u32 [#allocation18], 4
      %s176 = int_to_ptr.vmem [resolvable:$true] %s175
      %181 = dma.hbm_to_vmem [thread:$0]  %s174, 512, %s176, [#allocation17], 128, 128, 8
    $region65: #{tpu_custom_call.1} parent=1 // pred_fallthru
      _
    // Predicated region
    $region66: #{tpu_custom_call.1} parent=1 // pred_check
      _
    $region67: #{tpu_custom_call.1} parent=1 // pred_check_branch
      %183 = sbr.rel (0) target = $region69
    $region68: #{tpu_custom_call.1} parent=1 // pred_region
      _
    $region69: #{tpu_custom_call.1} parent=1 // pred_fallthru
      _
    // Predicated region
    $region70: #{tpu_custom_call.1} parent=1 // pred_check
      _
    $region71: #{tpu_custom_call.1} parent=1 // pred_check_branch
      %185 = sbr.rel (0) target = $region73
    $region72: #{tpu_custom_call.1} parent=1 // pred_region
      %187 = vsyncadd [#allocation20], 0
      %s188 = sshll.u32 %s17, 4
      %s189 = int_to_ptr.hbm [resolvable:$true] %s188
      %s190 = sshll.u32 [#allocation19], 4
      %s191 = int_to_ptr.vmem [resolvable:$true] %s190
      %196 = dma.hbm_to_vmem [thread:$0]  %s189, 512, %s191, [#allocation20], 128, 128, 8
    $region73: #{tpu_custom_call.1} parent=1 // pred_fallthru
      _
    // Predicated region
    $region74: #{tpu_custom_call.1} parent=1 // pred_check
      _
    $region75: #{tpu_custom_call.1} parent=1 // pred_check_branch
      %198 = sbr.rel (0) target = $region77
    $region76: #{tpu_custom_call.1} parent=1 // pred_region
      _
    $region77: #{tpu_custom_call.1} parent=1 // pred_fallthru
      _
    // Predicated region
    $region78: #{tpu_custom_call.1} parent=1 // pred_check
      _
    $region79: #{tpu_custom_call.1} parent=1 // pred_check_branch
      %200 = sbr.rel (0) target = $region81
    $region80: #{tpu_custom_call.1} parent=1 // pred_region
      _
    $region81: #{tpu_custom_call.1} parent=1 // pred_fallthru
      _
    // Predicated region
    $region82: #{tpu_custom_call.1} parent=1 // pred_check
      _
    $region83: #{tpu_custom_call.1} parent=1 // pred_check_branch
      %202 = sbr.rel (0) target = $region85
    $region84: #{tpu_custom_call.1} parent=1 // pred_region
      _
    $region85: #{tpu_custom_call.1} parent=1 // pred_fallthru
      _
    // Predicated region
    $region86: #{tpu_custom_call.1} parent=1 // pred_check
      _
    $region87: #{tpu_custom_call.1} parent=1 // pred_check_branch
      %204 = sbr.rel (0) target = $region89
    $region88: #{tpu_custom_call.1} parent=1 // pred_region
      %206 = dma.done [#allocation3], 128
    $region89: #{tpu_custom_call.1} parent=1 // pred_fallthru
      _
    // Predicated region
    $region90: #{tpu_custom_call.1} parent=1 // pred_check
      _
    $region91: #{tpu_custom_call.1} parent=1 // pred_check_branch
      %208 = sbr.rel (0) target = $region93
    $region92: #{tpu_custom_call.1} parent=1 // pred_region
      %210 = dma.done [#allocation5], 128
    $region93: #{tpu_custom_call.1} parent=1 // pred_fallthru
      _
    // Predicated region
    $region94: #{tpu_custom_call.1} parent=1 // pred_check
      _
    $region95: #{tpu_custom_call.1} parent=1 // pred_check_branch
      %212 = sbr.rel (0) target = $region97
    $region96: #{tpu_custom_call.1} parent=1 // pred_region
      %214 = dma.done [#allocation5], 256
    $region97: #{tpu_custom_call.1} parent=1 // pred_fallthru
      _
    // Predicated region
    $region98: #{tpu_custom_call.1} parent=1 // pred_check
      _
    $region99: #{tpu_custom_call.1} parent=1 // pred_check_branch
      %216 = sbr.rel (0) target = $region101
    $region100: #{tpu_custom_call.1} parent=1 // pred_region
      %218 = dma.done [#allocation8], 512
    $region101: #{tpu_custom_call.1} parent=1 // pred_fallthru
      _
    // Predicated region
    $region102: #{tpu_custom_call.1} parent=1 // pred_check
      _
    $region103: #{tpu_custom_call.1} parent=1 // pred_check_branch
      %220 = sbr.rel (0) target = $region105
    $region104: #{tpu_custom_call.1} parent=1 // pred_region
      %222 = dma.done [#allocation8], 512
    $region105: #{tpu_custom_call.1} parent=1 // pred_fallthru
      _
    // Predicated region
    $region106: #{tpu_custom_call.1} parent=1 // pred_check
      _
    $region107: #{tpu_custom_call.1} parent=1 // pred_check_branch
      %224 = sbr.rel (0) target = $region109
    $region108: #{tpu_custom_call.1} parent=1 // pred_region
      %226 = dma.done [#allocation11], 512
    $region109: #{tpu_custom_call.1} parent=1 // pred_fallthru
      _
    // Predicated region
    $region110: #{tpu_custom_call.1} parent=1 // pred_check
      _
    $region111: #{tpu_custom_call.1} parent=1 // pred_check_branch
      %228 = sbr.rel (0) target = $region113
    $region112: #{tpu_custom_call.1} parent=1 // pred_region
      %230 = dma.done [#allocation11], 512
    $region113: #{tpu_custom_call.1} parent=1 // pred_fallthru
      _
    // Predicated region
    $region114: #{tpu_custom_call.1} parent=1 // pred_check
      _
    $region115: #{tpu_custom_call.1} parent=1 // pred_check_branch
      %232 = sbr.rel (0) target = $region117
    $region116: #{tpu_custom_call.1} parent=1 // pred_region
      %234 = dma.done [#allocation14], 512
    $region117: #{tpu_custom_call.1} parent=1 // pred_fallthru
      _
    // Predicated region
    $region118: #{tpu_custom_call.1} parent=1 // pred_check
      _
    $region119: #{tpu_custom_call.1} parent=1 // pred_check_branch
      %236 = sbr.rel (0) target = $region121
    $region120: #{tpu_custom_call.1} parent=1 // pred_region
      %238 = dma.done [#allocation14], 512
    $region121: #{tpu_custom_call.1} parent=1 // pred_fallthru
      _
    // Predicated region
    $region122: #{tpu_custom_call.1} parent=1 // pred_check
      _
    $region123: #{tpu_custom_call.1} parent=1 // pred_check_branch
      %240 = sbr.rel (0) target = $region125
    $region124: #{tpu_custom_call.1} parent=1 // pred_region
      %242 = dma.done [#allocation17], 512
    $region125: #{tpu_custom_call.1} parent=1 // pred_fallthru
      _
    // Predicated region
    $region126: #{tpu_custom_call.1} parent=1 // pred_check
      _
    $region127: #{tpu_custom_call.1} parent=1 // pred_check_branch
      %244 = sbr.rel (0) target = $region129
    $region128: #{tpu_custom_call.1} parent=1 // pred_region
      %246 = dma.done [#allocation17], 512
    $region129: #{tpu_custom_call.1} parent=1 // pred_fallthru
      _
    // Predicated region
    $region130: #{tpu_custom_call.1} parent=1 // pred_check
      _
    $region131: #{tpu_custom_call.1} parent=1 // pred_check_branch
      %248 = sbr.rel (0) target = $region133
    $region132: #{tpu_custom_call.1} parent=1 // pred_region
      %250 = dma.done [#allocation20], 512
    $region133: #{tpu_custom_call.1} parent=1 // pred_fallthru
      _
    %v251 = vld [vmem:[#allocation2] sm:$0x3f]
    %v252 = vld [vmem:[#allocation6] sm:$0xff]
    %v253 = vld [vmem:[#allocation6 + $0x8] sm:$0xff]
    %v254 = vld [vmem:[%s3] sm:$0x1]
    %v256 = vperm.slane %v254, 0
    %vm258 = vcmask 130048
    %v260 = vsel %vm258, %v251, 0
    %262 = vmatpush.msra.mxu0 0.0
    %263 = vmatpush.msra.mxu0 0.0
    %264 = vmatpush.msra.mxu0 0.0
    %265 = vmatpush.msra.mxu0 0.0
    %266 = vmatpush.msra.mxu0 0.0
    %267 = vmatpush.msra.mxu0 0.0
    %268 = vmatpush.msra.mxu0 0.0
    %269 = vmatpush.msra.mxu0 0.0
    %270 = vmatpush.msra.mxu0 0.0
    %271 = vmatpush.msra.mxu0 0.0
    %272 = vmatpush.msra.mxu0 0.0
    %273 = vmatpush.msra.mxu0 0.0
    %274 = vmatpush.msra.mxu0 0.0
    %275 = vmatpush.msra.mxu0 0.0
    %276 = vmatpush.msra.mxu0 %v253
    %277 = vmatpush.msra.mxu0 %v252
    %278 = vmatmul.f32.gmra.mxu0 %v260
    %v279 = vpop.f32.mrf.mxu0
    %v280 = vadd.f32 %v256, %v279
    %281 = vdwg.mxu0
    %v282 = vmax.f32 %v280, 0.0
    %v283 = vld [vmem:[%s4] sm:$0x1]
    %v284 = vld [vmem:[%s4 + $0x1] sm:$0x1]
    %v285 = vld [vmem:[%s5] sm:$0x1]
    %v286 = vld [vmem:[%s6] sm:$0xff]
    %v287 = vld [vmem:[%s6 + $0x8] sm:$0xff]
    %v288 = vld [vmem:[%s6 + $0x10] sm:$0xff]
    %v289 = vld [vmem:[%s6 + $0x18] sm:$0xff]
    %vm290 = vcmask 261120
    %v292 = vsel %vm290, %v282, 0
    %294 = vmatpush.msra.mxu0 0.0
    %295 = vmatpush.msra.mxu0 0.0
    %296 = vmatpush.msra.mxu0 0.0
    %297 = vmatpush.msra.mxu0 0.0
    %298 = vmatpush.msra.mxu0 0.0
    %299 = vmatpush.msra.mxu0 0.0
    %300 = vmatpush.msra.mxu0 0.0
    %301 = vmatpush.msra.mxu0 0.0
    %302 = vmatpush.msra.mxu0 0.0
    %303 = vmatpush.msra.mxu0 0.0
    %304 = vmatpush.msra.mxu0 0.0
    %305 = vmatpush.msra.mxu0 0.0
    %306 = vmatpush.msra.mxu0 %v289
    %307 = vmatpush.msra.mxu0 %v288
    %308 = vmatpush.msra.mxu0 %v287
    %309 = vmatpush.msra.mxu0 %v286
    %310 = vmatmul.f32.gmra.mxu0 %v292
    %v311 = vpop.f32.mrf.mxu0
    %v312 = vadd.f32 0.0, %v311
    %313 = vdwg.mxu0
    %314 = vset.pattern.permute.xlu0 16
    %315 = vperm.xlu0 %314, %v251
    %v316 = vpop.permute.xlu0 %315
    %v318 = vperm.slane %v283, 0
    %v319 = vmul.f32 %v316, %v318
    %320 = vset.pattern.permute.xlu0 17
    %321 = vperm.xlu0 %320, %v251
    %v322 = vpop.permute.xlu0 %321
    %v324 = vperm.slane %v284, 0
    %v325 = vmul.f32 %v322, %v324
    %v326 = vadd.f32 %v319, %v325
    %v328 = vperm.slane %v285, 0
    %v330 = vadd.f32 %v326, %v328
    %v331 = vmax.f32 %v330, 0.0
    %v332 = vld [vmem:[#allocation7] sm:$0xff]
    %v333 = vld [vmem:[#allocation7 + $0x8] sm:$0xff]
    %v334 = vld [vmem:[#allocation7 + $0x10] sm:$0xff]
    %v335 = vld [vmem:[#allocation7 + $0x18] sm:$0xff]
    %v337 = vsel %vm290, %v331, 0
    %339 = vmatpush.msra.mxu0 0.0
    %340 = vmatpush.msra.mxu0 0.0
    %341 = vmatpush.msra.mxu0 0.0
    %342 = vmatpush.msra.mxu0 0.0
    %343 = vmatpush.msra.mxu0 0.0
    %344 = vmatpush.msra.mxu0 0.0
    %345 = vmatpush.msra.mxu0 0.0
    %346 = vmatpush.msra.mxu0 0.0
    %347 = vmatpush.msra.mxu0 0.0
    %348 = vmatpush.msra.mxu0 0.0
    %349 = vmatpush.msra.mxu0 0.0
    %350 = vmatpush.msra.mxu0 0.0
    %351 = vmatpush.msra.mxu0 %v335
    %352 = vmatpush.msra.mxu0 %v334
    %353 = vmatpush.msra.mxu0 %v333
    %354 = vmatpush.msra.mxu0 %v332
    %355 = vmatmul.f32.gmra.mxu0 %v337
    %v356 = vpop.f32.mrf.mxu0
    %v357 = vadd.f32 0.0, %v356
    %358 = vdwg.mxu0
    %v359 = vmul.f32 %v312, %v357
    %vm360 = vcmask 259072
    %v361 = vsel %vm360, %v359, 0.0
    %362 = vadd.xlane.f32.xlu0 %v361
    %v363 = vpop.xlane.xlu0 %362
    %v364 = vmul.f32 %v363, 0.17677669
    %365 = vset.pattern.permute.xlu0 18
    %366 = vperm.xlu0 %365, %v251
    %v367 = vpop.permute.xlu0 %366
    %v369 = vmul.f32 %v367, %v318
    %370 = vset.pattern.permute.xlu0 19
    %371 = vperm.xlu0 %370, %v251
    %v372 = vpop.permute.xlu0 %371
    %v374 = vmul.f32 %v372, %v324
    %v375 = vadd.f32 %v369, %v374
    %v376 = vadd.f32 %v375, %v328
    %v377 = vmax.f32 %v376, 0.0
    %v379 = vsel %vm290, %v377, 0
    %381 = vmatpush.msra.mxu0 0.0
    %382 = vmatpush.msra.mxu0 0.0
    %383 = vmatpush.msra.mxu0 0.0
    %384 = vmatpush.msra.mxu0 0.0
    %385 = vmatpush.msra.mxu0 0.0
    %386 = vmatpush.msra.mxu0 0.0
    %387 = vmatpush.msra.mxu0 0.0
    %388 = vmatpush.msra.mxu0 0.0
    %389 = vmatpush.msra.mxu0 0.0
    %390 = vmatpush.msra.mxu0 0.0
    %391 = vmatpush.msra.mxu0 0.0
    %392 = vmatpush.msra.mxu0 0.0
    %393 = vmatpush.msra.mxu0 %v335
    %394 = vmatpush.msra.mxu0 %v334
    %395 = vmatpush.msra.mxu0 %v333
    %396 = vmatpush.msra.mxu0 %v332
    %397 = vmatmul.f32.gmra.mxu0 %v379
    %v398 = vpop.f32.mrf.mxu0
    %v399 = vadd.f32 0.0, %v398
    %400 = vdwg.mxu0
    %v401 = vmul.f32 %v312, %v399
    %v402 = vsel %vm360, %v401, 0.0
    %403 = vadd.xlane.f32.xlu0 %v402
    %v404 = vpop.xlane.xlu0 %403
    %v405 = vmul.f32 %v404, 0.17677669
    %406 = vset.pattern.permute.xlu0 20
    %407 = vperm.xlu0 %406, %v251
    %v408 = vpop.permute.xlu0 %407
    %v410 = vmul.f32 %v408, %v318
    %411 = vset.pattern.permute.xlu0 21
    %412 = vperm.xlu0 %411, %v251
    %v413 = vpop.permute.xlu0 %412
    %v415 = vmul.f32 %v413, %v324
    %v416 = vadd.f32 %v410, %v415
    %v417 = vadd.f32 %v416, %v328
    %v418 = vmax.f32 %v417, 0.0
    %v420 = vsel %vm290, %v418, 0
    %422 = vmatpush.msra.mxu0 0.0
    %423 = vmatpush.msra.mxu0 0.0
    %424 = vmatpush.msra.mxu0 0.0
    %425 = vmatpush.msra.mxu0 0.0
    %426 = vmatpush.msra.mxu0 0.0
    %427 = vmatpush.msra.mxu0 0.0
    %428 = vmatpush.msra.mxu0 0.0
    %429 = vmatpush.msra.mxu0 0.0
    %430 = vmatpush.msra.mxu0 0.0
    %431 = vmatpush.msra.mxu0 0.0
    %432 = vmatpush.msra.mxu0 0.0
    %433 = vmatpush.msra.mxu0 0.0
    %434 = vmatpush.msra.mxu0 %v335
    %435 = vmatpush.msra.mxu0 %v334
    %436 = vmatpush.msra.mxu0 %v333
    %437 = vmatpush.msra.mxu0 %v332
    %438 = vmatmul.f32.gmra.mxu0 %v420
    %v439 = vpop.f32.mrf.mxu0
    %v440 = vadd.f32 0.0, %v439
    %441 = vdwg.mxu0
    %v442 = vmul.f32 %v312, %v440
    %v443 = vsel %vm360, %v442, 0.0
    %444 = vadd.xlane.f32.xlu0 %v443
    %v445 = vpop.xlane.xlu0 %444
    %v446 = vmul.f32 %v445, 0.17677669
    %v447 = vmax.f32 %v364, %v405
    %v448 = vmax.f32 %v447, %v446
    %v449 = vsub.f32 %v364, %v448
    %v450 = vmul.f32 %v449, 1.442695
    %v451 = vpow.pop %v450
    %v452 = vmul.f32 %v451, %v357
    %v453 = vsub.f32 %v405, %v448
    %v454 = vmul.f32 %v453, 1.442695
    %v455 = vpow.pop %v454
    %v456 = vadd.f32 %v451, %v455
    %v457 = vmul.f32 %v455, %v399
    %v458 = vadd.f32 %v452, %v457
    %v459 = vsub.f32 %v446, %v448
    %v460 = vmul.f32 %v459, 1.442695
    %v461 = vpow.pop %v460
    %v462 = vadd.f32 %v456, %v461
    %v463 = vmul.f32 %v461, %v440
    %v464 = vadd.f32 %v458, %v463
    %v465 = vrcp.pop %v462
    %v466 = vmul.f32 %v464, %v465
    %v467 = vld [vmem:[#allocation9] sm:$0xff]
    %v468 = vld [vmem:[#allocation9 + $0x8] sm:$0xff]
    %v469 = vld [vmem:[#allocation9 + $0x10] sm:$0xff]
    %v470 = vld [vmem:[#allocation9 + $0x18] sm:$0xff]
    %472 = vrot.lane.b32.xlu0 %v466, 96
    %v473 = vpop.permute.xlu0 %472
    %v474 = vsel %vm290, %v473, 0
    %476 = vmatpush.msra.mxu0 0.0
    %477 = vmatpush.msra.mxu0 0.0
    %478 = vmatpush.msra.mxu0 0.0
    %479 = vmatpush.msra.mxu0 0.0
    %480 = vmatpush.msra.mxu0 0.0
    %481 = vmatpush.msra.mxu0 0.0
    %482 = vmatpush.msra.mxu0 0.0
    %483 = vmatpush.msra.mxu0 0.0
    %484 = vmatpush.msra.mxu0 0.0
    %485 = vmatpush.msra.mxu0 0.0
    %486 = vmatpush.msra.mxu0 0.0
    %487 = vmatpush.msra.mxu0 0.0
    %488 = vmatpush.msra.mxu0 %v470
    %489 = vmatpush.msra.mxu0 %v469
    %490 = vmatpush.msra.mxu0 %v468
    %491 = vmatpush.msra.mxu0 %v467
    %492 = vmatmul.f32.gmra.mxu0 %v474
    %v493 = vpop.f32.mrf.mxu0
    %v494 = vadd.f32 0.0, %v493
    %495 = vdwg.mxu0
    %v496 = vld [vmem:[#allocation10] sm:$0xff]
    %v497 = vld [vmem:[#allocation10 + $0x8] sm:$0xff]
    %v498 = vld [vmem:[#allocation10 + $0x10] sm:$0xff]
    %v499 = vld [vmem:[#allocation10 + $0x18] sm:$0xff]
    %v500 = vld [vmem:[#allocation12] sm:$0xff]
    %v501 = vld [vmem:[#allocation12 + $0x8] sm:$0xff]
    %v502 = vld [vmem:[#allocation12 + $0x10] sm:$0xff]
    %v503 = vld [vmem:[#allocation12 + $0x18] sm:$0xff]
    %v505 = vsel %vm290, %v494, 0
    %507 = vmatpush.msra.mxu0 0.0
    %508 = vmatpush.msra.mxu0 0.0
    %509 = vmatpush.msra.mxu0 0.0
    %510 = vmatpush.msra.mxu0 0.0
    %511 = vmatpush.msra.mxu0 0.0
    %512 = vmatpush.msra.mxu0 0.0
    %513 = vmatpush.msra.mxu0 0.0
    %514 = vmatpush.msra.mxu0 0.0
    %515 = vmatpush.msra.mxu0 0.0
    %516 = vmatpush.msra.mxu0 0.0
    %517 = vmatpush.msra.mxu0 0.0
    %518 = vmatpush.msra.mxu0 0.0
    %519 = vmatpush.msra.mxu0 %v503
    %520 = vmatpush.msra.mxu0 %v502
    %521 = vmatpush.msra.mxu0 %v501
    %522 = vmatpush.msra.mxu0 %v500
    %523 = vmatmul.f32.gmra.mxu0 %v505
    %v524 = vpop.f32.mrf.mxu0
    %v525 = vadd.f32 0.0, %v524
    %526 = vdwg.mxu0
    %527 = vmatpush.msra.mxu0 0.0
    %528 = vmatpush.msra.mxu0 0.0
    %529 = vmatpush.msra.mxu0 0.0
    %530 = vmatpush.msra.mxu0 0.0
    %531 = vmatpush.msra.mxu0 0.0
    %532 = vmatpush.msra.mxu0 0.0
    %533 = vmatpush.msra.mxu0 0.0
    %534 = vmatpush.msra.mxu0 0.0
    %535 = vmatpush.msra.mxu0 0.0
    %536 = vmatpush.msra.mxu0 0.0
    %537 = vmatpush.msra.mxu0 0.0
    %538 = vmatpush.msra.mxu0 0.0
    %539 = vmatpush.msra.mxu0 %v499
    %540 = vmatpush.msra.mxu0 %v498
    %541 = vmatpush.msra.mxu0 %v497
    %542 = vmatpush.msra.mxu0 %v496
    %543 = vmatmul.f32.gmra.mxu0 %v292
    %v544 = vpop.f32.mrf.mxu0
    %v545 = vadd.f32 %v525, %v544
    %546 = vdwg.mxu0
    %v547 = vld [vmem:[%s11] sm:$0x1]
    %v549 = vperm.slane %v547, 0
    %v551 = vadd.f32 %v545, %v549
    %v552 = vmax.f32 %v551, 0.0
    %v553 = vld [vmem:[#allocation4] sm:$0x3f]
    %v554 = vld [vmem:[#allocation13] sm:$0xff]
    %v555 = vld [vmem:[#allocation13 + $0x8] sm:$0xff]
    %v556 = vld [vmem:[#allocation13 + $0x10] sm:$0xff]
    %v557 = vld [vmem:[#allocation13 + $0x18] sm:$0xff]
    %v559 = vsel %vm290, %v552, 0
    %561 = vmatpush.msra.mxu0 0.0
    %562 = vmatpush.msra.mxu0 0.0
    %563 = vmatpush.msra.mxu0 0.0
    %564 = vmatpush.msra.mxu0 0.0
    %565 = vmatpush.msra.mxu0 0.0
    %566 = vmatpush.msra.mxu0 0.0
    %567 = vmatpush.msra.mxu0 0.0
    %568 = vmatpush.msra.mxu0 0.0
    %569 = vmatpush.msra.mxu0 0.0
    %570 = vmatpush.msra.mxu0 0.0
    %571 = vmatpush.msra.mxu0 0.0
    %572 = vmatpush.msra.mxu0 0.0
    %573 = vmatpush.msra.mxu0 %v557
    %574 = vmatpush.msra.mxu0 %v556
    %575 = vmatpush.msra.mxu0 %v555
    %576 = vmatpush.msra.mxu0 %v554
    %577 = vmatmul.f32.gmra.mxu0 %v559
    %v578 = vpop.f32.mrf.mxu0
    %v579 = vadd.f32 0.0, %v578
    %580 = vdwg.mxu0
    %582 = vrot.lane.b32.xlu0 %v579, 96
    %v583 = vpop.permute.xlu0 %582
    %v584 = vsel %vm290, %v579, 0
    %v586 = vsel %vm290, %v583, 0
    %588 = vmatpush.xpose.msra.mxu0 0.0
    %589 = vmatpush.xpose.msra.mxu0 0.0
    %590 = vmatpush.xpose.msra.mxu0 0.0
    %591 = vmatpush.xpose.msra.mxu0 0.0
    %592 = vmatpush.xpose.msra.mxu0 0.0
    %593 = vmatpush.xpose.msra.mxu0 0.0
    %594 = vmatpush.xpose.msra.mxu0 0.0
    %595 = vmatpush.xpose.msra.mxu0 0.0
    %596 = vmatpush.xpose.msra.mxu0 0.0
    %597 = vmatpush.xpose.msra.mxu0 0.0
    %598 = vmatpush.xpose.msra.mxu0 0.0
    %599 = vmatpush.xpose.msra.mxu0 0.0
    %600 = vmatpush.xpose.msra.mxu0 0.0
    %601 = vmatpush.xpose.msra.mxu0 0.0
    %602 = vmatpush.xpose.msra.mxu0 0.0
    %603 = vmatpush.xpose.msra.mxu0 %v586
    %604 = vmatmul.f32.gmra.mxu0 %v584
    %v605 = vpop.f32.mrf.mxu0
    %v606 = vadd.f32 0.0, %v605
    %607 = vdwg.mxu0
    %v608 = vmul.f32 %v606, 0.17677669
    %v609 = vadd.f32 %v608, %v553
    %vm610 = vcmask 46080
    %v611 = vsel %vm610, %v609, -inf
    %612 = vmax.xlane.f32.xlu0 %v611
    %v613 = vpop.xlane.xlu0 %612
    %v614 = vsub.f32 %v609, %v613
    %v615 = vmul.f32 %v614, 1.442695
    %v616 = vpow.pop %v615
    %v617 = vsel %vm610, %v616, 0.0
    %618 = vadd.xlane.f32.xlu0 %v617
    %v619 = vpop.xlane.xlu0 %618
    %v620 = vrcp.pop %v619
    %v621 = vmul.f32 %v616, %v620
    %622 = vrot.lane.b32.xlu0 %v579, 64
    %v623 = vpop.permute.xlu0 %622
    %vm624 = vcmask 48128
    %v626 = vsel %vm624, %v621, 0
    %vm628 = vcmask 1045504
    %v629 = vsel %vm628, %v623, 0
    %631 = vmatpush.msra.mxu0 0.0
    %632 = vmatpush.msra.mxu0 0.0
    %633 = vmatpush.msra.mxu0 0.0
    %634 = vmatpush.msra.mxu0 0.0
    %635 = vmatpush.msra.mxu0 0.0
    %636 = vmatpush.msra.mxu0 0.0
    %637 = vmatpush.msra.mxu0 0.0
    %638 = vmatpush.msra.mxu0 0.0
    %639 = vmatpush.msra.mxu0 0.0
    %640 = vmatpush.msra.mxu0 0.0
    %641 = vmatpush.msra.mxu0 0.0
    %642 = vmatpush.msra.mxu0 0.0
    %643 = vmatpush.msra.mxu0 0.0
    %644 = vmatpush.msra.mxu0 0.0
    %645 = vmatpush.msra.mxu0 0.0
    %646 = vmatpush.msra.mxu0 %v629
    %647 = vmatmul.f32.gmra.mxu0 %v626
    %v648 = vpop.f32.mrf.mxu0
    %v649 = vadd.f32 0.0, %v648
    %650 = vdwg.mxu0
    %v651 = vld [vmem:[#allocation15] sm:$0xff]
    %v652 = vld [vmem:[#allocation15 + $0x8] sm:$0xff]
    %v653 = vld [vmem:[#allocation15 + $0x10] sm:$0xff]
    %v654 = vld [vmem:[#allocation15 + $0x18] sm:$0xff]
    %v656 = vsel %vm290, %v649, 0
    %658 = vmatpush.msra.mxu0 0.0
    %659 = vmatpush.msra.mxu0 0.0
    %660 = vmatpush.msra.mxu0 0.0
    %661 = vmatpush.msra.mxu0 0.0
    %662 = vmatpush.msra.mxu0 0.0
    %663 = vmatpush.msra.mxu0 0.0
    %664 = vmatpush.msra.mxu0 0.0
    %665 = vmatpush.msra.mxu0 0.0
    %666 = vmatpush.msra.mxu0 0.0
    %667 = vmatpush.msra.mxu0 0.0
    %668 = vmatpush.msra.mxu0 0.0
    %669 = vmatpush.msra.mxu0 0.0
    %670 = vmatpush.msra.mxu0 %v654
    %671 = vmatpush.msra.mxu0 %v653
    %672 = vmatpush.msra.mxu0 %v652
    %673 = vmatpush.msra.mxu0 %v651
    %674 = vmatmul.f32.gmra.mxu0 %v656
    %v675 = vpop.f32.mrf.mxu0
    %v676 = vadd.f32 0.0, %v675
    %677 = vdwg.mxu0
    %v678 = vld [vmem:[#allocation16] sm:$0xff]
    %v679 = vld [vmem:[#allocation16 + $0x8] sm:$0xff]
    %v680 = vld [vmem:[#allocation16 + $0x10] sm:$0xff]
    %v681 = vld [vmem:[#allocation16 + $0x18] sm:$0xff]
    %v682 = vld [vmem:[#allocation18] sm:$0xff]
    %v683 = vld [vmem:[#allocation18 + $0x8] sm:$0xff]
    %v684 = vld [vmem:[#allocation18 + $0x10] sm:$0xff]
    %v685 = vld [vmem:[#allocation18 + $0x18] sm:$0xff]
    %v687 = vsel %vm290, %v676, 0
    %689 = vmatpush.msra.mxu0 0.0
    %690 = vmatpush.msra.mxu0 0.0
    %691 = vmatpush.msra.mxu0 0.0
    %692 = vmatpush.msra.mxu0 0.0
    %693 = vmatpush.msra.mxu0 0.0
    %694 = vmatpush.msra.mxu0 0.0
    %695 = vmatpush.msra.mxu0 0.0
    %696 = vmatpush.msra.mxu0 0.0
    %697 = vmatpush.msra.mxu0 0.0
    %698 = vmatpush.msra.mxu0 0.0
    %699 = vmatpush.msra.mxu0 0.0
    %700 = vmatpush.msra.mxu0 0.0
    %701 = vmatpush.msra.mxu0 %v685
    %702 = vmatpush.msra.mxu0 %v684
    %703 = vmatpush.msra.mxu0 %v683
    %704 = vmatpush.msra.mxu0 %v682
    %705 = vmatmul.f32.gmra.mxu0 %v687
    %v706 = vpop.f32.mrf.mxu0
    %v707 = vadd.f32 0.0, %v706
    %708 = vdwg.mxu0
    %709 = vmatpush.msra.mxu0 0.0
    %710 = vmatpush.msra.mxu0 0.0
    %711 = vmatpush.msra.mxu0 0.0
    %712 = vmatpush.msra.mxu0 0.0
    %713 = vmatpush.msra.mxu0 0.0
    %714 = vmatpush.msra.mxu0 0.0
    %715 = vmatpush.msra.mxu0 0.0
    %716 = vmatpush.msra.mxu0 0.0
    %717 = vmatpush.msra.mxu0 0.0
    %718 = vmatpush.msra.mxu0 0.0
    %719 = vmatpush.msra.mxu0 0.0
    %720 = vmatpush.msra.mxu0 0.0
    %721 = vmatpush.msra.mxu0 %v681
    %722 = vmatpush.msra.mxu0 %v680
    %723 = vmatpush.msra.mxu0 %v679
    %724 = vmatpush.msra.mxu0 %v678
    %725 = vmatmul.f32.gmra.mxu0 %v559
    %v726 = vpop.f32.mrf.mxu0
    %v727 = vadd.f32 %v707, %v726
    %728 = vdwg.mxu0
    %v729 = vld [vmem:[%s16] sm:$0x1]
    %v731 = vperm.slane %v729, 0
    %v733 = vadd.f32 %v727, %v731
    %v734 = vmax.f32 %v733, 0.0
    %v736 = vsel %vm290, %v734, 0
    %738 = vmatpush.msra.mxu0 0.0
    %739 = vmatpush.msra.mxu0 0.0
    %740 = vmatpush.msra.mxu0 0.0
    %741 = vmatpush.msra.mxu0 0.0
    %742 = vmatpush.msra.mxu0 0.0
    %743 = vmatpush.msra.mxu0 0.0
    %744 = vmatpush.msra.mxu0 0.0
    %745 = vmatpush.msra.mxu0 0.0
    %746 = vmatpush.msra.mxu0 0.0
    %747 = vmatpush.msra.mxu0 0.0
    %748 = vmatpush.msra.mxu0 0.0
    %749 = vmatpush.msra.mxu0 0.0
    %750 = vmatpush.msra.mxu0 %v557
    %751 = vmatpush.msra.mxu0 %v556
    %752 = vmatpush.msra.mxu0 %v555
    %753 = vmatpush.msra.mxu0 %v554
    %754 = vmatmul.f32.gmra.mxu0 %v736
    %v755 = vpop.f32.mrf.mxu0
    %v756 = vadd.f32 0.0, %v755
    %757 = vdwg.mxu0
    %759 = vrot.lane.b32.xlu0 %v756, 96
    %v760 = vpop.permute.xlu0 %759
    %v761 = vsel %vm290, %v756, 0
    %v763 = vsel %vm290, %v760, 0
    %765 = vmatpush.xpose.msra.mxu0 0.0
    %766 = vmatpush.xpose.msra.mxu0 0.0
    %767 = vmatpush.xpose.msra.mxu0 0.0
    %768 = vmatpush.xpose.msra.mxu0 0.0
    %769 = vmatpush.xpose.msra.mxu0 0.0
    %770 = vmatpush.xpose.msra.mxu0 0.0
    %771 = vmatpush.xpose.msra.mxu0 0.0
    %772 = vmatpush.xpose.msra.mxu0 0.0
    %773 = vmatpush.xpose.msra.mxu0 0.0
    %774 = vmatpush.xpose.msra.mxu0 0.0
    %775 = vmatpush.xpose.msra.mxu0 0.0
    %776 = vmatpush.xpose.msra.mxu0 0.0
    %777 = vmatpush.xpose.msra.mxu0 0.0
    %778 = vmatpush.xpose.msra.mxu0 0.0
    %779 = vmatpush.xpose.msra.mxu0 0.0
    %780 = vmatpush.xpose.msra.mxu0 %v763
    %781 = vmatmul.f32.gmra.mxu0 %v761
    %v782 = vpop.f32.mrf.mxu0
    %v783 = vadd.f32 0.0, %v782
    %784 = vdwg.mxu0
    %v785 = vmul.f32 %v783, 0.17677669
    %v786 = vadd.f32 %v785, %v553
    %v787 = vsel %vm610, %v786, -inf
    %788 = vmax.xlane.f32.xlu0 %v787
    %v789 = vpop.xlane.xlu0 %788
    %v790 = vsub.f32 %v786, %v789
    %v791 = vmul.f32 %v790, 1.442695
    %v792 = vpow.pop %v791
    %v793 = vsel %vm610, %v792, 0.0
    %794 = vadd.xlane.f32.xlu0 %v793
    %v795 = vpop.xlane.xlu0 %794
    %v796 = vrcp.pop %v795
    %v797 = vmul.f32 %v792, %v796
    %798 = vrot.lane.b32.xlu0 %v756, 64
    %v799 = vpop.permute.xlu0 %798
    %v801 = vsel %vm624, %v797, 0
    %v803 = vsel %vm628, %v799, 0
    %805 = vmatpush.msra.mxu0 0.0
    %806 = vmatpush.msra.mxu0 0.0
    %807 = vmatpush.msra.mxu0 0.0
    %808 = vmatpush.msra.mxu0 0.0
    %809 = vmatpush.msra.mxu0 0.0
    %810 = vmatpush.msra.mxu0 0.0
    %811 = vmatpush.msra.mxu0 0.0
    %812 = vmatpush.msra.mxu0 0.0
    %813 = vmatpush.msra.mxu0 0.0
    %814 = vmatpush.msra.mxu0 0.0
    %815 = vmatpush.msra.mxu0 0.0
    %816 = vmatpush.msra.mxu0 0.0
    %817 = vmatpush.msra.mxu0 0.0
    %818 = vmatpush.msra.mxu0 0.0
    %819 = vmatpush.msra.mxu0 0.0
    %820 = vmatpush.msra.mxu0 %v803
    %821 = vmatmul.f32.gmra.mxu0 %v801
    %v822 = vpop.f32.mrf.mxu0
    %v823 = vadd.f32 0.0, %v822
    %824 = vdwg.mxu0
    %v826 = vsel %vm290, %v823, 0
    %828 = vmatpush.msra.mxu0 0.0
    %829 = vmatpush.msra.mxu0 0.0
    %830 = vmatpush.msra.mxu0 0.0
    %831 = vmatpush.msra.mxu0 0.0
    %832 = vmatpush.msra.mxu0 0.0
    %833 = vmatpush.msra.mxu0 0.0
    %834 = vmatpush.msra.mxu0 0.0
    %835 = vmatpush.msra.mxu0 0.0
    %836 = vmatpush.msra.mxu0 0.0
    %837 = vmatpush.msra.mxu0 0.0
    %838 = vmatpush.msra.mxu0 0.0
    %839 = vmatpush.msra.mxu0 0.0
    %840 = vmatpush.msra.mxu0 %v654
    %841 = vmatpush.msra.mxu0 %v653
    %842 = vmatpush.msra.mxu0 %v652
    %843 = vmatpush.msra.mxu0 %v651
    %844 = vmatmul.f32.gmra.mxu0 %v826
    %v845 = vpop.f32.mrf.mxu0
    %v846 = vadd.f32 0.0, %v845
    %847 = vdwg.mxu0
    %v849 = vsel %vm290, %v846, 0
    %851 = vmatpush.msra.mxu0 0.0
    %852 = vmatpush.msra.mxu0 0.0
    %853 = vmatpush.msra.mxu0 0.0
    %854 = vmatpush.msra.mxu0 0.0
    %855 = vmatpush.msra.mxu0 0.0
    %856 = vmatpush.msra.mxu0 0.0
    %857 = vmatpush.msra.mxu0 0.0
    %858 = vmatpush.msra.mxu0 0.0
    %859 = vmatpush.msra.mxu0 0.0
    %860 = vmatpush.msra.mxu0 0.0
    %861 = vmatpush.msra.mxu0 0.0
    %862 = vmatpush.msra.mxu0 0.0
    %863 = vmatpush.msra.mxu0 %v685
    %864 = vmatpush.msra.mxu0 %v684
    %865 = vmatpush.msra.mxu0 %v683
    %866 = vmatpush.msra.mxu0 %v682
    %867 = vmatmul.f32.gmra.mxu0 %v849
    %v868 = vpop.f32.mrf.mxu0
    %v869 = vadd.f32 0.0, %v868
    %870 = vdwg.mxu0
    %871 = vmatpush.msra.mxu0 0.0
    %872 = vmatpush.msra.mxu0 0.0
    %873 = vmatpush.msra.mxu0 0.0
    %874 = vmatpush.msra.mxu0 0.0
    %875 = vmatpush.msra.mxu0 0.0
    %876 = vmatpush.msra.mxu0 0.0
    %877 = vmatpush.msra.mxu0 0.0
    %878 = vmatpush.msra.mxu0 0.0
    %879 = vmatpush.msra.mxu0 0.0
    %880 = vmatpush.msra.mxu0 0.0
    %881 = vmatpush.msra.mxu0 0.0
    %882 = vmatpush.msra.mxu0 0.0
    %883 = vmatpush.msra.mxu0 %v681
    %884 = vmatpush.msra.mxu0 %v680
    %885 = vmatpush.msra.mxu0 %v679
    %886 = vmatpush.msra.mxu0 %v678
    %887 = vmatmul.f32.gmra.mxu0 %v736
    %v888 = vpop.f32.mrf.mxu0
    %v889 = vadd.f32 %v869, %v888
    %890 = vdwg.mxu0
    %v891 = vadd.f32 %v889, %v731
    %v892 = vmax.f32 %v891, 0.0
    %v894 = vsel %vm290, %v892, 0
    %896 = vmatpush.msra.mxu0 0.0
    %897 = vmatpush.msra.mxu0 0.0
    %898 = vmatpush.msra.mxu0 0.0
    %899 = vmatpush.msra.mxu0 0.0
    %900 = vmatpush.msra.mxu0 0.0
    %901 = vmatpush.msra.mxu0 0.0
    %902 = vmatpush.msra.mxu0 0.0
    %903 = vmatpush.msra.mxu0 0.0
    %904 = vmatpush.msra.mxu0 0.0
    %905 = vmatpush.msra.mxu0 0.0
    %906 = vmatpush.msra.mxu0 0.0
    %907 = vmatpush.msra.mxu0 0.0
    %908 = vmatpush.msra.mxu0 %v557
    %909 = vmatpush.msra.mxu0 %v556
    %910 = vmatpush.msra.mxu0 %v555
    %911 = vmatpush.msra.mxu0 %v554
    %912 = vmatmul.f32.gmra.mxu0 %v894
    %v913 = vpop.f32.mrf.mxu0
    %v914 = vadd.f32 0.0, %v913
    %915 = vdwg.mxu0
    %917 = vrot.lane.b32.xlu0 %v914, 96
    %v918 = vpop.permute.xlu0 %917
    %v919 = vsel %vm290, %v914, 0
    %v921 = vsel %vm290, %v918, 0
    %923 = vmatpush.xpose.msra.mxu0 0.0
    %924 = vmatpush.xpose.msra.mxu0 0.0
    %925 = vmatpush.xpose.msra.mxu0 0.0
    %926 = vmatpush.xpose.msra.mxu0 0.0
    %927 = vmatpush.xpose.msra.mxu0 0.0
    %928 = vmatpush.xpose.msra.mxu0 0.0
    %929 = vmatpush.xpose.msra.mxu0 0.0
    %930 = vmatpush.xpose.msra.mxu0 0.0
    %931 = vmatpush.xpose.msra.mxu0 0.0
    %932 = vmatpush.xpose.msra.mxu0 0.0
    %933 = vmatpush.xpose.msra.mxu0 0.0
    %934 = vmatpush.xpose.msra.mxu0 0.0
    %935 = vmatpush.xpose.msra.mxu0 0.0
    %936 = vmatpush.xpose.msra.mxu0 0.0
    %937 = vmatpush.xpose.msra.mxu0 0.0
    %938 = vmatpush.xpose.msra.mxu0 %v921
    %939 = vmatmul.f32.gmra.mxu0 %v919
    %v940 = vpop.f32.mrf.mxu0
    %v941 = vadd.f32 0.0, %v940
    %942 = vdwg.mxu0
    %v943 = vmul.f32 %v941, 0.17677669
    %v944 = vadd.f32 %v943, %v553
    %v945 = vsel %vm610, %v944, -inf
    %946 = vmax.xlane.f32.xlu0 %v945
    %v947 = vpop.xlane.xlu0 %946
    %v948 = vsub.f32 %v944, %v947
    %v949 = vmul.f32 %v948, 1.442695
    %v950 = vpow.pop %v949
    %v951 = vsel %vm610, %v950, 0.0
    %952 = vadd.xlane.f32.xlu0 %v951
    %v953 = vpop.xlane.xlu0 %952
    %v954 = vrcp.pop %v953
    %v955 = vmul.f32 %v950, %v954
    %956 = vrot.lane.b32.xlu0 %v914, 64
    %v957 = vpop.permute.xlu0 %956
    %v959 = vsel %vm624, %v955, 0
    %v961 = vsel %vm628, %v957, 0
    %963 = vmatpush.msra.mxu0 0.0
    %964 = vmatpush.msra.mxu0 0.0
    %965 = vmatpush.msra.mxu0 0.0
    %966 = vmatpush.msra.mxu0 0.0
    %967 = vmatpush.msra.mxu0 0.0
    %968 = vmatpush.msra.mxu0 0.0
    %969 = vmatpush.msra.mxu0 0.0
    %970 = vmatpush.msra.mxu0 0.0
    %971 = vmatpush.msra.mxu0 0.0
    %972 = vmatpush.msra.mxu0 0.0
    %973 = vmatpush.msra.mxu0 0.0
    %974 = vmatpush.msra.mxu0 0.0
    %975 = vmatpush.msra.mxu0 0.0
    %976 = vmatpush.msra.mxu0 0.0
    %977 = vmatpush.msra.mxu0 0.0
    %978 = vmatpush.msra.mxu0 %v961
    %979 = vmatmul.f32.gmra.mxu0 %v959
    %v980 = vpop.f32.mrf.mxu0
    %v981 = vadd.f32 0.0, %v980
    %982 = vdwg.mxu0
    %v984 = vsel %vm290, %v981, 0
    %986 = vmatpush.msra.mxu0 0.0
    %987 = vmatpush.msra.mxu0 0.0
    %988 = vmatpush.msra.mxu0 0.0
    %989 = vmatpush.msra.mxu0 0.0
    %990 = vmatpush.msra.mxu0 0.0
    %991 = vmatpush.msra.mxu0 0.0
    %992 = vmatpush.msra.mxu0 0.0
    %993 = vmatpush.msra.mxu0 0.0
    %994 = vmatpush.msra.mxu0 0.0
    %995 = vmatpush.msra.mxu0 0.0
    %996 = vmatpush.msra.mxu0 0.0
    %997 = vmatpush.msra.mxu0 0.0
    %998 = vmatpush.msra.mxu0 %v654
    %999 = vmatpush.msra.mxu0 %v653
    %1000 = vmatpush.msra.mxu0 %v652
    %1001 = vmatpush.msra.mxu0 %v651
    %1002 = vmatmul.f32.gmra.mxu0 %v984
    %v1003 = vpop.f32.mrf.mxu0
    %v1004 = vadd.f32 0.0, %v1003
    %1005 = vdwg.mxu0
    %v1007 = vsel %vm290, %v1004, 0
    %1009 = vmatpush.msra.mxu0 0.0
    %1010 = vmatpush.msra.mxu0 0.0
    %1011 = vmatpush.msra.mxu0 0.0
    %1012 = vmatpush.msra.mxu0 0.0
    %1013 = vmatpush.msra.mxu0 0.0
    %1014 = vmatpush.msra.mxu0 0.0
    %1015 = vmatpush.msra.mxu0 0.0
    %1016 = vmatpush.msra.mxu0 0.0
    %1017 = vmatpush.msra.mxu0 0.0
    %1018 = vmatpush.msra.mxu0 0.0
    %1019 = vmatpush.msra.mxu0 0.0
    %1020 = vmatpush.msra.mxu0 0.0
    %1021 = vmatpush.msra.mxu0 %v685
    %1022 = vmatpush.msra.mxu0 %v684
    %1023 = vmatpush.msra.mxu0 %v683
    %1024 = vmatpush.msra.mxu0 %v682
    %1025 = vmatmul.f32.gmra.mxu0 %v1007
    %v1026 = vpop.f32.mrf.mxu0
    %v1027 = vadd.f32 0.0, %v1026
    %1028 = vdwg.mxu0
    %1029 = vmatpush.msra.mxu0 0.0
    %1030 = vmatpush.msra.mxu0 0.0
    %1031 = vmatpush.msra.mxu0 0.0
    %1032 = vmatpush.msra.mxu0 0.0
    %1033 = vmatpush.msra.mxu0 0.0
    %1034 = vmatpush.msra.mxu0 0.0
    %1035 = vmatpush.msra.mxu0 0.0
    %1036 = vmatpush.msra.mxu0 0.0
    %1037 = vmatpush.msra.mxu0 0.0
    %1038 = vmatpush.msra.mxu0 0.0
    %1039 = vmatpush.msra.mxu0 0.0
    %1040 = vmatpush.msra.mxu0 0.0
    %1041 = vmatpush.msra.mxu0 %v681
    %1042 = vmatpush.msra.mxu0 %v680
    %1043 = vmatpush.msra.mxu0 %v679
    %1044 = vmatpush.msra.mxu0 %v678
    %1045 = vmatmul.f32.gmra.mxu0 %v894
    %v1046 = vpop.f32.mrf.mxu0
    %v1047 = vadd.f32 %v1027, %v1046
    %1048 = vdwg.mxu0
    %v1049 = vadd.f32 %v1047, %v731
    %v1050 = vmax.f32 %v1049, 0.0
    %v1051 = vld [vmem:[#allocation19] sm:$0xff]
    %v1052 = vld [vmem:[#allocation19 + $0x8] sm:$0xff]
    %v1053 = vld [vmem:[#allocation19 + $0x10] sm:$0xff]
    %v1054 = vld [vmem:[#allocation19 + $0x18] sm:$0xff]
    %v1055 = vld [vmem:[%s18] sm:$0x1]
    %v1057 = vperm.slane %v1055, 0
    %v1060 = vsel %vm290, %v1050, 0
    %1062 = vmatpush.msra.mxu0 0.0
    %1063 = vmatpush.msra.mxu0 0.0
    %1064 = vmatpush.msra.mxu0 0.0
    %1065 = vmatpush.msra.mxu0 0.0
    %1066 = vmatpush.msra.mxu0 0.0
    %1067 = vmatpush.msra.mxu0 0.0
    %1068 = vmatpush.msra.mxu0 0.0
    %1069 = vmatpush.msra.mxu0 0.0
    %1070 = vmatpush.msra.mxu0 0.0
    %1071 = vmatpush.msra.mxu0 0.0
    %1072 = vmatpush.msra.mxu0 0.0
    %1073 = vmatpush.msra.mxu0 0.0
    %1074 = vmatpush.msra.mxu0 %v1054
    %1075 = vmatpush.msra.mxu0 %v1053
    %1076 = vmatpush.msra.mxu0 %v1052
    %1077 = vmatpush.msra.mxu0 %v1051
    %1078 = vmatmul.f32.gmra.mxu0 %v1060
    %v1079 = vpop.f32.mrf.mxu0
    %v1080 = vadd.f32 %v1057, %v1079
    %1081 = vdwg.mxu0
    %vm1082 = vcmp.ge.f32.partialorder %v1080, 0.0
    %v1083 = vmul.f32 %v1080, 0.01
    %v1084 = vsel %vm1082, %v1080, %v1083
    %v1085 = vld [vmem:[%s19] sm:$0xff]
    %v1086 = vld [vmem:[%s19 + $0x8] sm:$0xff]
    %v1087 = vld [vmem:[%s19 + $0x10] sm:$0xff]
    %v1088 = vld [vmem:[%s19 + $0x18] sm:$0xff]
    %v1089 = vld [vmem:[%s20] sm:$0x1]
    %v1091 = vperm.slane %v1089, 0
    %v1094 = vsel %vm290, %v1084, 0
    %1096 = vmatpush.msra.mxu0 0.0
    %1097 = vmatpush.msra.mxu0 0.0
    %1098 = vmatpush.msra.mxu0 0.0
    %1099 = vmatpush.msra.mxu0 0.0
    %1100 = vmatpush.msra.mxu0 0.0
    %1101 = vmatpush.msra.mxu0 0.0
    %1102 = vmatpush.msra.mxu0 0.0
    %1103 = vmatpush.msra.mxu0 0.0
    %1104 = vmatpush.msra.mxu0 0.0
    %1105 = vmatpush.msra.mxu0 0.0
    %1106 = vmatpush.msra.mxu0 0.0
    %1107 = vmatpush.msra.mxu0 0.0
    %1108 = vmatpush.msra.mxu0 %v1088
    %1109 = vmatpush.msra.mxu0 %v1087
    %1110 = vmatpush.msra.mxu0 %v1086
    %1111 = vmatpush.msra.mxu0 %v1085
    %1112 = vmatmul.f32.gmra.mxu0 %v1094
    %v1113 = vpop.f32.mrf.mxu0
    %v1114 = vadd.f32 %v1091, %v1113
    %1115 = vdwg.mxu0
    %v1116 = vtanh.pop %v1114
    %vm1117 = vcmask 13312
    %1118 = vst.msk [vmem:[%s21] sm:$0x3f] %vm1117, %v1116
    // Predicated region
    $region134: #{tpu_custom_call.1} parent=1 // pred_check
      _
    $region135: #{tpu_custom_call.1} parent=1 // pred_check_branch
      %1120 = sbr.rel (0) target = $region137
    $region136: #{tpu_custom_call.1} parent=1 // pred_region
      _
    $region137: #{tpu_custom_call.1} parent=1 // pred_fallthru
      _
    // Predicated region
    $region138: #{tpu_custom_call.1} parent=1 // pred_check
      _
    $region139: #{tpu_custom_call.1} parent=1 // pred_check_branch
      %1122 = sbr.rel (0) target = $region141
    $region140: #{tpu_custom_call.1} parent=1 // pred_region
      _
    $region141: #{tpu_custom_call.1} parent=1 // pred_fallthru
      _
    %1123 = vsyncpa [#allocation3], 1
    %1124 = vsyncpa [#allocation5], 1
    %1125 = vsyncpa [#allocation8], 1
    %1126 = vsyncpa [#allocation11], 1
    %1127 = vsyncpa [#allocation14], 1
    %1128 = vsyncpa [#allocation17], 1
    %1129 = vsyncpa [#allocation20], 1

</llo_original>
